<compile_context>
chip_gen: v7x
topology: tpu7x:2x2x1
jax: 0.10.0
libtpu: 0.0.40
codegen_flags: <defaults>
</compile_context>

<pallas_src>
import math

import jax
import jax.numpy as jnp
import numpy as np
from jax.experimental import pallas as pl
from jax.experimental.pallas import tpu as pltpu


def rvnn_kernel(h_e_ref, w_agg_ref, w_x_ref, b_x_ref, w_iouh_ref, w_couh_ref,
                out_ref):
    h_e = h_e_ref[...]          # (tb, N, F)  original node features (batch block)
    w_agg = w_agg_ref[...]      # (tb, N, N)  normalized adj^T (precomputed)
    w_x = w_x_ref[...]          # (F, 3F)     [w_ioux | w_coux]
    b_x = b_x_ref[...]          # (1, 3F)     [b_ioux + b_iouh | b_coux + b_couh]
    w_iouh = w_iouh_ref[...]    # (F, 2F)
    w_couh = w_couh_ref[...]    # (F, F)

    tb, N, F = h_e.shape

    # Hoisted x-path: one (tb*N, F) @ (F, 3F) GEMM covering every post at once
    # (xi is always read from the ORIGINAL, never-modified h_e).
    h_flat = h_e.reshape(tb * N, F)
    x_path = (jnp.dot(h_flat, w_x, preferred_element_type=jnp.float32)
              + b_x).reshape(tb, N, 3 * F)

    # Initial parent aggregation: one batched MXU matmul.
    h_parent = jnp.einsum("bij,bjf->bif", w_agg, h_e,
                          preferred_element_type=jnp.float32)

    # Sequential recurrence over posts (N is small and static -> unrolled so
    # the LLO scheduler sees the whole serial chain).  State stays in
    # registers; nothing touches VMEM until the final store.
    rows = []
    for i in range(N):
        xp = h_parent[:, i, :]                      # (tb, F)
        xpath_i = x_path[:, i, :]                   # (tb, 3F)

        iou = (xpath_i[:, :2 * F]
               + jnp.dot(xp, w_iouh, preferred_element_type=jnp.float32))
        r = jax.nn.sigmoid(iou[:, :F])
        z = jax.nn.sigmoid(iou[:, F:])
        hc = jnp.tanh(xpath_i[:, 2 * F:]
                      + jnp.dot(xp * r, w_couh,
                                preferred_element_type=jnp.float32))
        h_new = z * xp + (1.0 - z) * hc             # (tb, F)
        rows.append(h_new)

        if i + 1 < N:
            # Exact rank-1 update: row i of the running copy changes from
            # h_e[:, i, :] to h_new, so h_parent changes by column i of w_agg
            # (outer) delta.  Replaces the full (N,N)x(N,F) re-aggregation.
            delta = h_new - h_e[:, i, :]            # (tb, F)
            h_parent = h_parent + w_agg[:, :, i:i + 1] * delta[:, None, :]

    # Single lane-dense output store: last dim N*F is a multiple of 128.
    out_ref[...] = jnp.stack(rows, axis=1).reshape(tb, 1, N * F)


def rvnn_forward(h_e, adj, params, *, batch_block=None):
    """h_e: (B, N, F); adj: (B, N, N).  Linear weights are pre-transposed to
    (in, out) so the kernel computes x @ W + b (same math as nn.Linear)."""
    B, N, F = h_e.shape

    # Batch block size: small enough to bound per-core vreg pressure, and for
    # small B give >=2 grid steps so v7x's two TensorCores both get work.
    if batch_block is None:
        batch_block = 1 if B <= 8 else 8
    assert B % batch_block == 0, "B must be divisible by batch_block"
    tb = batch_block
    grid = (B // tb,)

    # Loop-invariant Tree_Parent_AGG weight, computed once outside the kernel.
    d = jnp.sum(adj, axis=-1)
    d_inv = jnp.where(d != 0, 1.0 / d, jnp.zeros_like(d))
    w_agg = jnp.transpose(adj, (0, 2, 1)) * d_inv[:, :, None]    # (B, N, N)

    # Fuse the hoisted x-path Linears and fold in ALL biases
    # (iou = x@Wioux + xp@Wiouh + (b_ioux + b_iouh), similarly for cou).
    w_x = jnp.concatenate([params["w_ioux"], params["w_coux"]], axis=1)   # (F, 3F)
    b_x = jnp.concatenate([params["b_ioux"] + params["b_iouh"],
                           params["b_coux"] + params["b_couh"]], axis=1)  # (1, 3F)

    w_iouh = params["w_iouh"]
    w_couh = params["w_couh"]

    grid_spec = pltpu.PrefetchScalarGridSpec(
        num_scalar_prefetch=0,
        grid=grid,
        in_specs=[
            pl.BlockSpec((tb, N, F), lambda b: (b, 0, 0)),          # h_e block
            pl.BlockSpec((tb, N, N), lambda b: (b, 0, 0)),          # w_agg block
            pl.BlockSpec((F, 3 * F), lambda b: (0, 0)),             # fused x weights
            pl.BlockSpec((1, 3 * F), lambda b: (0, 0)),             # fused biases
            pl.BlockSpec((F, 2 * F), lambda b: (0, 0)),             # w_iouh
            pl.BlockSpec((F, F), lambda b: (0, 0)),                 # w_couh
        ],
        out_specs=pl.BlockSpec((tb, 1, N * F), lambda b: (b, 0, 0)),
    )

    out_flat = pl.pallas_call(
        rvnn_kernel,
        out_shape=jax.ShapeDtypeStruct((B, 1, N * F), jnp.float32),
        grid_spec=grid_spec,
        compiler_params=pltpu.CompilerParams(
            dimension_semantics=("parallel",),
            vmem_limit_bytes=32 * 1024 * 1024,   # sized against v7x's scoped VMEM
        ),
    )(h_e, w_agg, w_x, b_x, w_iouh, w_couh)

    return out_flat.reshape(B, N, F)


def rvnn_reference(h_e, adj, params):
    """Pure-JAX mirror of the PyTorch RvNN.forward (full re-aggregation)."""
    def tree_parent_agg(h, a):
        a_t = jnp.transpose(a, (0, 2, 1))
        d = jnp.sum(a, axis=-1)
        d = jnp.where(d != 0, 1.0 / d, jnp.zeros_like(d))
        return jnp.einsum("bij,bjf->bif", a_t * d[:, :, None], h)

    B, N, F = h_e.shape
    h_parent = tree_parent_agg(h_e, adj)
    h_copy = h_e
    for i in range(N):
        x = h_e[:, i, :]
        xp = h_parent[:, i, :]
        iou = (x @ params["w_ioux"] + params["b_ioux"]
               + xp @ params["w_iouh"] + params["b_iouh"])
        r = jax.nn.sigmoid(iou[:, :F])
        z = jax.nn.sigmoid(iou[:, F:])
        hc = jnp.tanh(x @ params["w_coux"] + params["b_coux"]
                      + (xp * r) @ params["w_couh"] + params["b_couh"])
        h_new = z * xp + (1.0 - z) * hc
        h_copy = h_copy.at[:, i, :].set(h_new)
        h_parent = tree_parent_agg(h_copy, adj)
    return h_copy


if __name__ == "__main__":
    B, N, F = 2, 8, 32       # batch, num posts, f_in == f_out (required by module)
    key = jax.random.PRNGKey(0)
    keys = jax.random.split(key, 10)

    h_e = jax.random.normal(keys[0], (B, N, F), jnp.float32)
    adj = jax.random.bernoulli(keys[1], 0.3, (B, N, N)).astype(jnp.float32)

    def linear_init(kw, kb, fin, fout):
        bound = 1.0 / math.sqrt(fin)
        w = jax.random.uniform(kw, (fin, fout), jnp.float32, -bound, bound)
        b = jax.random.uniform(kb, (1, fout), jnp.float32, -bound, bound)
        return w, b

    w_ioux, b_ioux = linear_init(keys[2], keys[3], F, 2 * F)
    w_iouh, b_iouh = linear_init(keys[4], keys[5], F, 2 * F)
    w_coux, b_coux = linear_init(keys[6], keys[7], F, F)
    w_couh, b_couh = linear_init(keys[8], keys[9], F, F)

    params = dict(w_ioux=w_ioux, b_ioux=b_ioux,
                  w_iouh=w_iouh, b_iouh=b_iouh,
                  w_coux=w_coux, b_coux=b_coux,
                  w_couh=w_couh, b_couh=b_couh)

    out = rvnn_forward(h_e, adj, params)
    out = jax.block_until_ready(out)

    ref = rvnn_reference(h_e, adj, params)
    assert out.shape == (B, N, F)
    np.testing.assert_allclose(np.asarray(out), np.asarray(ref),
                               rtol=1e-4, atol=1e-4)
    print("KERNEL_OK")
</pallas_src>

<mosaic_0001>
module attributes {stable_mosaic.version = 11 : i64} {
  func.func @rvnn_kernel(%arg0: i32, %arg1: memref<1x8x32xf32, #tpu.memory_space<vmem>>, %arg2: memref<1x8x8xf32, #tpu.memory_space<vmem>>, %arg3: memref<32x96xf32, #tpu.memory_space<vmem>>, %arg4: memref<1x96xf32, #tpu.memory_space<vmem>>, %arg5: memref<32x64xf32, #tpu.memory_space<vmem>>, %arg6: memref<32x32xf32, #tpu.memory_space<vmem>>, %arg7: memref<1x1x256xf32, #tpu.memory_space<vmem>>) attributes {dimension_semantics = [#tpu.dimension_semantics<parallel>], iteration_bounds = array<i64: 2>, scalar_prefetch = 0 : i64, scratch_operands = 0 : i64, tpu.core_type = #tpu.core_type<tc>, window_params = [{transform_indices = @transform_0, window_bounds = array<i64: 1, 8, 32>}, {transform_indices = @transform_1, window_bounds = array<i64: 1, 8, 8>}, {pipeline_mode = #tpu.pipeline_mode<synchronous>, transform_indices = @transform_2, window_bounds = array<i64: 32, 96>}, {pipeline_mode = #tpu.pipeline_mode<synchronous>, transform_indices = @transform_3, window_bounds = array<i64: 1, 96>}, {pipeline_mode = #tpu.pipeline_mode<synchronous>, transform_indices = @transform_4, window_bounds = array<i64: 32, 64>}, {pipeline_mode = #tpu.pipeline_mode<synchronous>, transform_indices = @transform_5, window_bounds = array<i64: 32, 32>}, {transform_indices = @transform_6, window_bounds = array<i64: 1, 1, 256>}]} {
    %c0 = arith.constant 0 : index
    %c0_0 = arith.constant 0 : index
    %c0_1 = arith.constant 0 : index
    %0 = vector.load %arg1[%c0, %c0_0, %c0_1] : memref<1x8x32xf32, #tpu.memory_space<vmem>>, vector<1x8x32xf32>
    %c0_2 = arith.constant 0 : index
    %c0_3 = arith.constant 0 : index
    %c0_4 = arith.constant 0 : index
    %1 = vector.load %arg2[%c0_2, %c0_3, %c0_4] : memref<1x8x8xf32, #tpu.memory_space<vmem>>, vector<1x8x8xf32>
    %c0_5 = arith.constant 0 : index
    %c0_6 = arith.constant 0 : index
    %2 = vector.load %arg3[%c0_5, %c0_6] : memref<32x96xf32, #tpu.memory_space<vmem>>, vector<32x96xf32>
    %c0_7 = arith.constant 0 : index
    %c0_8 = arith.constant 0 : index
    %3 = vector.load %arg4[%c0_7, %c0_8] : memref<1x96xf32, #tpu.memory_space<vmem>>, vector<1x96xf32>
    %c0_9 = arith.constant 0 : index
    %c0_10 = arith.constant 0 : index
    %4 = vector.load %arg5[%c0_9, %c0_10] : memref<32x64xf32, #tpu.memory_space<vmem>>, vector<32x64xf32>
    %c0_11 = arith.constant 0 : index
    %c0_12 = arith.constant 0 : index
    %5 = vector.load %arg6[%c0_11, %c0_12] : memref<32x32xf32, #tpu.memory_space<vmem>>, vector<32x32xf32>
    %6 = vector.shape_cast %0 : vector<1x8x32xf32> to vector<8x32xf32>
    %cst = arith.constant dense<0.000000e+00> : vector<8x96xf32>
    %7 = tpu.matmul %6, %2, %cst {dimension_numbers = #tpu.dot_dimension_numbers<[1], [0], [0], [1], [0, 0, 1, 1], [], []>} : vector<8x32xf32>, vector<32x96xf32>, vector<8x96xf32> -> vector<8x96xf32>
    %8 = vector.broadcast %3 : vector<1x96xf32> to vector<8x96xf32>
    %9 = arith.addf %7, %8 : vector<8x96xf32>
    %10 = vector.shape_cast %9 : vector<8x96xf32> to vector<1x8x96xf32>
    "tpu.trace_start"() <{level = 10 : i32, message = "bij,bjf->bif"}> : () -> ()
    %cst_13 = arith.constant dense<0.000000e+00> : vector<1x8x32xf32>
    %11 = tpu.matmul %1, %0, %cst_13 {dimension_numbers = #tpu.dot_dimension_numbers<[2], [1], [1], [2], [0, 0, 0, 1, 1, 2], [0], [0]>} : vector<1x8x8xf32>, vector<1x8x32xf32>, vector<1x8x32xf32> -> vector<1x8x32xf32>
    "tpu.trace_stop"() : () -> ()
    %12 = vector.extract_strided_slice %11 {offsets = [0, 0, 0], sizes = [1, 1, 32], strides = [1, 1, 1]} : vector<1x8x32xf32> to vector<1x1x32xf32>
    %13 = vector.shape_cast %12 : vector<1x1x32xf32> to vector<1x32xf32>
    %14 = vector.extract_strided_slice %10 {offsets = [0, 0, 0], sizes = [1, 1, 96], strides = [1, 1, 1]} : vector<1x8x96xf32> to vector<1x1x96xf32>
    %15 = vector.shape_cast %14 : vector<1x1x96xf32> to vector<1x96xf32>
    %16 = vector.extract_strided_slice %15 {offsets = [0, 0], sizes = [1, 64], strides = [1, 1]} : vector<1x96xf32> to vector<1x64xf32>
    %cst_14 = arith.constant dense<0.000000e+00> : vector<1x64xf32>
    %17 = tpu.matmul %13, %4, %cst_14 {dimension_numbers = #tpu.dot_dimension_numbers<[1], [0], [0], [1], [0, 0, 1, 1], [], []>} : vector<1x32xf32>, vector<32x64xf32>, vector<1x64xf32> -> vector<1x64xf32>
    %18 = arith.addf %16, %17 : vector<1x64xf32>
    %19 = vector.extract_strided_slice %18 {offsets = [0, 0], sizes = [1, 32], strides = [1, 1]} : vector<1x64xf32> to vector<1x32xf32>
    %20 = arith.negf %19 : vector<1x32xf32>
    %21 = math.exp %20 : vector<1x32xf32>
    %cst_15 = arith.constant 1.000000e+00 : f32
    %22 = vector.broadcast %cst_15 : f32 to vector<1x32xf32>
    %23 = arith.addf %22, %21 : vector<1x32xf32>
    %24 = arith.divf %22, %23 : vector<1x32xf32>
    %25 = vector.extract_strided_slice %18 {offsets = [0, 32], sizes = [1, 32], strides = [1, 1]} : vector<1x64xf32> to vector<1x32xf32>
    %26 = arith.negf %25 : vector<1x32xf32>
    %27 = math.exp %26 : vector<1x32xf32>
    %cst_16 = arith.constant 1.000000e+00 : f32
    %28 = vector.broadcast %cst_16 : f32 to vector<1x32xf32>
    %29 = arith.addf %28, %27 : vector<1x32xf32>
    %30 = arith.divf %28, %29 : vector<1x32xf32>
    %31 = vector.extract_strided_slice %15 {offsets = [0, 64], sizes = [1, 32], strides = [1, 1]} : vector<1x96xf32> to vector<1x32xf32>
    %32 = arith.mulf %13, %24 : vector<1x32xf32>
    %cst_17 = arith.constant dense<0.000000e+00> : vector<1x32xf32>
    %33 = tpu.matmul %32, %5, %cst_17 {dimension_numbers = #tpu.dot_dimension_numbers<[1], [0], [0], [1], [0, 0, 1, 1], [], []>} : vector<1x32xf32>, vector<32x32xf32>, vector<1x32xf32> -> vector<1x32xf32>
    %34 = arith.addf %31, %33 : vector<1x32xf32>
    %35 = math.tanh %34 : vector<1x32xf32>
    %36 = arith.mulf %30, %13 : vector<1x32xf32>
    %cst_18 = arith.constant 1.000000e+00 : f32
    %37 = vector.broadcast %cst_18 : f32 to vector<1x32xf32>
    %38 = arith.subf %37, %30 : vector<1x32xf32>
    %39 = arith.mulf %38, %35 : vector<1x32xf32>
    %40 = arith.addf %36, %39 : vector<1x32xf32>
    %41 = vector.extract_strided_slice %0 {offsets = [0, 0, 0], sizes = [1, 1, 32], strides = [1, 1, 1]} : vector<1x8x32xf32> to vector<1x1x32xf32>
    %42 = vector.shape_cast %41 : vector<1x1x32xf32> to vector<1x32xf32>
    %43 = arith.subf %40, %42 : vector<1x32xf32>
    %44 = vector.extract_strided_slice %1 {offsets = [0, 0, 0], sizes = [1, 8, 1], strides = [1, 1, 1]} : vector<1x8x8xf32> to vector<1x8x1xf32>
    %45 = vector.shape_cast %43 : vector<1x32xf32> to vector<1x1x32xf32>
    %46 = vector.broadcast %44 : vector<1x8x1xf32> to vector<1x8x32xf32>
    %47 = vector.broadcast %45 : vector<1x1x32xf32> to vector<1x8x32xf32>
    %48 = arith.mulf %46, %47 : vector<1x8x32xf32>
    %49 = arith.addf %11, %48 : vector<1x8x32xf32>
    %50 = vector.extract_strided_slice %49 {offsets = [0, 1, 0], sizes = [1, 1, 32], strides = [1, 1, 1]} : vector<1x8x32xf32> to vector<1x1x32xf32>
    %51 = vector.shape_cast %50 : vector<1x1x32xf32> to vector<1x32xf32>
    %52 = vector.extract_strided_slice %10 {offsets = [0, 1, 0], sizes = [1, 1, 96], strides = [1, 1, 1]} : vector<1x8x96xf32> to vector<1x1x96xf32>
    %53 = vector.shape_cast %52 : vector<1x1x96xf32> to vector<1x96xf32>
    %54 = vector.extract_strided_slice %53 {offsets = [0, 0], sizes = [1, 64], strides = [1, 1]} : vector<1x96xf32> to vector<1x64xf32>
    %cst_19 = arith.constant dense<0.000000e+00> : vector<1x64xf32>
    %55 = tpu.matmul %51, %4, %cst_19 {dimension_numbers = #tpu.dot_dimension_numbers<[1], [0], [0], [1], [0, 0, 1, 1], [], []>} : vector<1x32xf32>, vector<32x64xf32>, vector<1x64xf32> -> vector<1x64xf32>
    %56 = arith.addf %54, %55 : vector<1x64xf32>
    %57 = vector.extract_strided_slice %56 {offsets = [0, 0], sizes = [1, 32], strides = [1, 1]} : vector<1x64xf32> to vector<1x32xf32>
    %58 = arith.negf %57 : vector<1x32xf32>
    %59 = math.exp %58 : vector<1x32xf32>
    %cst_20 = arith.constant 1.000000e+00 : f32
    %60 = vector.broadcast %cst_20 : f32 to vector<1x32xf32>
    %61 = arith.addf %60, %59 : vector<1x32xf32>
    %62 = arith.divf %60, %61 : vector<1x32xf32>
    %63 = vector.extract_strided_slice %56 {offsets = [0, 32], sizes = [1, 32], strides = [1, 1]} : vector<1x64xf32> to vector<1x32xf32>
    %64 = arith.negf %63 : vector<1x32xf32>
    %65 = math.exp %64 : vector<1x32xf32>
    %cst_21 = arith.constant 1.000000e+00 : f32
    %66 = vector.broadcast %cst_21 : f32 to vector<1x32xf32>
    %67 = arith.addf %66, %65 : vector<1x32xf32>
    %68 = arith.divf %66, %67 : vector<1x32xf32>
    %69 = vector.extract_strided_slice %53 {offsets = [0, 64], sizes = [1, 32], strides = [1, 1]} : vector<1x96xf32> to vector<1x32xf32>
    %70 = arith.mulf %51, %62 : vector<1x32xf32>
    %cst_22 = arith.constant dense<0.000000e+00> : vector<1x32xf32>
    %71 = tpu.matmul %70, %5, %cst_22 {dimension_numbers = #tpu.dot_dimension_numbers<[1], [0], [0], [1], [0, 0, 1, 1], [], []>} : vector<1x32xf32>, vector<32x32xf32>, vector<1x32xf32> -> vector<1x32xf32>
    %72 = arith.addf %69, %71 : vector<1x32xf32>
    %73 = math.tanh %72 : vector<1x32xf32>
    %74 = arith.mulf %68, %51 : vector<1x32xf32>
    %cst_23 = arith.constant 1.000000e+00 : f32
    %75 = vector.broadcast %cst_23 : f32 to vector<1x32xf32>
    %76 = arith.subf %75, %68 : vector<1x32xf32>
    %77 = arith.mulf %76, %73 : vector<1x32xf32>
    %78 = arith.addf %74, %77 : vector<1x32xf32>
    %79 = vector.extract_strided_slice %0 {offsets = [0, 1, 0], sizes = [1, 1, 32], strides = [1, 1, 1]} : vector<1x8x32xf32> to vector<1x1x32xf32>
    %80 = vector.shape_cast %79 : vector<1x1x32xf32> to vector<1x32xf32>
    %81 = arith.subf %78, %80 : vector<1x32xf32>
    %82 = vector.extract_strided_slice %1 {offsets = [0, 0, 1], sizes = [1, 8, 1], strides = [1, 1, 1]} : vector<1x8x8xf32> to vector<1x8x1xf32>
    %83 = vector.shape_cast %81 : vector<1x32xf32> to vector<1x1x32xf32>
    %84 = vector.broadcast %82 : vector<1x8x1xf32> to vector<1x8x32xf32>
    %85 = vector.broadcast %83 : vector<1x1x32xf32> to vector<1x8x32xf32>
    %86 = arith.mulf %84, %85 : vector<1x8x32xf32>
    %87 = arith.addf %49, %86 : vector<1x8x32xf32>
    %88 = vector.extract_strided_slice %87 {offsets = [0, 2, 0], sizes = [1, 1, 32], strides = [1, 1, 1]} : vector<1x8x32xf32> to vector<1x1x32xf32>
    %89 = vector.shape_cast %88 : vector<1x1x32xf32> to vector<1x32xf32>
    %90 = vector.extract_strided_slice %10 {offsets = [0, 2, 0], sizes = [1, 1, 96], strides = [1, 1, 1]} : vector<1x8x96xf32> to vector<1x1x96xf32>
    %91 = vector.shape_cast %90 : vector<1x1x96xf32> to vector<1x96xf32>
    %92 = vector.extract_strided_slice %91 {offsets = [0, 0], sizes = [1, 64], strides = [1, 1]} : vector<1x96xf32> to vector<1x64xf32>
    %cst_24 = arith.constant dense<0.000000e+00> : vector<1x64xf32>
    %93 = tpu.matmul %89, %4, %cst_24 {dimension_numbers = #tpu.dot_dimension_numbers<[1], [0], [0], [1], [0, 0, 1, 1], [], []>} : vector<1x32xf32>, vector<32x64xf32>, vector<1x64xf32> -> vector<1x64xf32>
    %94 = arith.addf %92, %93 : vector<1x64xf32>
    %95 = vector.extract_strided_slice %94 {offsets = [0, 0], sizes = [1, 32], strides = [1, 1]} : vector<1x64xf32> to vector<1x32xf32>
    %96 = arith.negf %95 : vector<1x32xf32>
    %97 = math.exp %96 : vector<1x32xf32>
    %cst_25 = arith.constant 1.000000e+00 : f32
    %98 = vector.broadcast %cst_25 : f32 to vector<1x32xf32>
    %99 = arith.addf %98, %97 : vector<1x32xf32>
    %100 = arith.divf %98, %99 : vector<1x32xf32>
    %101 = vector.extract_strided_slice %94 {offsets = [0, 32], sizes = [1, 32], strides = [1, 1]} : vector<1x64xf32> to vector<1x32xf32>
    %102 = arith.negf %101 : vector<1x32xf32>
    %103 = math.exp %102 : vector<1x32xf32>
    %cst_26 = arith.constant 1.000000e+00 : f32
    %104 = vector.broadcast %cst_26 : f32 to vector<1x32xf32>
    %105 = arith.addf %104, %103 : vector<1x32xf32>
    %106 = arith.divf %104, %105 : vector<1x32xf32>
    %107 = vector.extract_strided_slice %91 {offsets = [0, 64], sizes = [1, 32], strides = [1, 1]} : vector<1x96xf32> to vector<1x32xf32>
    %108 = arith.mulf %89, %100 : vector<1x32xf32>
    %cst_27 = arith.constant dense<0.000000e+00> : vector<1x32xf32>
    %109 = tpu.matmul %108, %5, %cst_27 {dimension_numbers = #tpu.dot_dimension_numbers<[1], [0], [0], [1], [0, 0, 1, 1], [], []>} : vector<1x32xf32>, vector<32x32xf32>, vector<1x32xf32> -> vector<1x32xf32>
    %110 = arith.addf %107, %109 : vector<1x32xf32>
    %111 = math.tanh %110 : vector<1x32xf32>
    %112 = arith.mulf %106, %89 : vector<1x32xf32>
    %cst_28 = arith.constant 1.000000e+00 : f32
    %113 = vector.broadcast %cst_28 : f32 to vector<1x32xf32>
    %114 = arith.subf %113, %106 : vector<1x32xf32>
    %115 = arith.mulf %114, %111 : vector<1x32xf32>
    %116 = arith.addf %112, %115 : vector<1x32xf32>
    %117 = vector.extract_strided_slice %0 {offsets = [0, 2, 0], sizes = [1, 1, 32], strides = [1, 1, 1]} : vector<1x8x32xf32> to vector<1x1x32xf32>
    %118 = vector.shape_cast %117 : vector<1x1x32xf32> to vector<1x32xf32>
    %119 = arith.subf %116, %118 : vector<1x32xf32>
    %120 = vector.extract_strided_slice %1 {offsets = [0, 0, 2], sizes = [1, 8, 1], strides = [1, 1, 1]} : vector<1x8x8xf32> to vector<1x8x1xf32>
    %121 = vector.shape_cast %119 : vector<1x32xf32> to vector<1x1x32xf32>
    %122 = vector.broadcast %120 : vector<1x8x1xf32> to vector<1x8x32xf32>
    %123 = vector.broadcast %121 : vector<1x1x32xf32> to vector<1x8x32xf32>
    %124 = arith.mulf %122, %123 : vector<1x8x32xf32>
    %125 = arith.addf %87, %124 : vector<1x8x32xf32>
    %126 = vector.extract_strided_slice %125 {offsets = [0, 3, 0], sizes = [1, 1, 32], strides = [1, 1, 1]} : vector<1x8x32xf32> to vector<1x1x32xf32>
    %127 = vector.shape_cast %126 : vector<1x1x32xf32> to vector<1x32xf32>
    %128 = vector.extract_strided_slice %10 {offsets = [0, 3, 0], sizes = [1, 1, 96], strides = [1, 1, 1]} : vector<1x8x96xf32> to vector<1x1x96xf32>
    %129 = vector.shape_cast %128 : vector<1x1x96xf32> to vector<1x96xf32>
    %130 = vector.extract_strided_slice %129 {offsets = [0, 0], sizes = [1, 64], strides = [1, 1]} : vector<1x96xf32> to vector<1x64xf32>
    %cst_29 = arith.constant dense<0.000000e+00> : vector<1x64xf32>
    %131 = tpu.matmul %127, %4, %cst_29 {dimension_numbers = #tpu.dot_dimension_numbers<[1], [0], [0], [1], [0, 0, 1, 1], [], []>} : vector<1x32xf32>, vector<32x64xf32>, vector<1x64xf32> -> vector<1x64xf32>
    %132 = arith.addf %130, %131 : vector<1x64xf32>
    %133 = vector.extract_strided_slice %132 {offsets = [0, 0], sizes = [1, 32], strides = [1, 1]} : vector<1x64xf32> to vector<1x32xf32>
    %134 = arith.negf %133 : vector<1x32xf32>
    %135 = math.exp %134 : vector<1x32xf32>
    %cst_30 = arith.constant 1.000000e+00 : f32
    %136 = vector.broadcast %cst_30 : f32 to vector<1x32xf32>
    %137 = arith.addf %136, %135 : vector<1x32xf32>
    %138 = arith.divf %136, %137 : vector<1x32xf32>
    %139 = vector.extract_strided_slice %132 {offsets = [0, 32], sizes = [1, 32], strides = [1, 1]} : vector<1x64xf32> to vector<1x32xf32>
    %140 = arith.negf %139 : vector<1x32xf32>
    %141 = math.exp %140 : vector<1x32xf32>
    %cst_31 = arith.constant 1.000000e+00 : f32
    %142 = vector.broadcast %cst_31 : f32 to vector<1x32xf32>
    %143 = arith.addf %142, %141 : vector<1x32xf32>
    %144 = arith.divf %142, %143 : vector<1x32xf32>
    %145 = vector.extract_strided_slice %129 {offsets = [0, 64], sizes = [1, 32], strides = [1, 1]} : vector<1x96xf32> to vector<1x32xf32>
    %146 = arith.mulf %127, %138 : vector<1x32xf32>
    %cst_32 = arith.constant dense<0.000000e+00> : vector<1x32xf32>
    %147 = tpu.matmul %146, %5, %cst_32 {dimension_numbers = #tpu.dot_dimension_numbers<[1], [0], [0], [1], [0, 0, 1, 1], [], []>} : vector<1x32xf32>, vector<32x32xf32>, vector<1x32xf32> -> vector<1x32xf32>
    %148 = arith.addf %145, %147 : vector<1x32xf32>
    %149 = math.tanh %148 : vector<1x32xf32>
    %150 = arith.mulf %144, %127 : vector<1x32xf32>
    %cst_33 = arith.constant 1.000000e+00 : f32
    %151 = vector.broadcast %cst_33 : f32 to vector<1x32xf32>
    %152 = arith.subf %151, %144 : vector<1x32xf32>
    %153 = arith.mulf %152, %149 : vector<1x32xf32>
    %154 = arith.addf %150, %153 : vector<1x32xf32>
    %155 = vector.extract_strided_slice %0 {offsets = [0, 3, 0], sizes = [1, 1, 32], strides = [1, 1, 1]} : vector<1x8x32xf32> to vector<1x1x32xf32>
    %156 = vector.shape_cast %155 : vector<1x1x32xf32> to vector<1x32xf32>
    %157 = arith.subf %154, %156 : vector<1x32xf32>
    %158 = vector.extract_strided_slice %1 {offsets = [0, 0, 3], sizes = [1, 8, 1], strides = [1, 1, 1]} : vector<1x8x8xf32> to vector<1x8x1xf32>
    %159 = vector.shape_cast %157 : vector<1x32xf32> to vector<1x1x32xf32>
    %160 = vector.broadcast %158 : vector<1x8x1xf32> to vector<1x8x32xf32>
    %161 = vector.broadcast %159 : vector<1x1x32xf32> to vector<1x8x32xf32>
    %162 = arith.mulf %160, %161 : vector<1x8x32xf32>
    %163 = arith.addf %125, %162 : vector<1x8x32xf32>
    %164 = vector.extract_strided_slice %163 {offsets = [0, 4, 0], sizes = [1, 1, 32], strides = [1, 1, 1]} : vector<1x8x32xf32> to vector<1x1x32xf32>
    %165 = vector.shape_cast %164 : vector<1x1x32xf32> to vector<1x32xf32>
    %166 = vector.extract_strided_slice %10 {offsets = [0, 4, 0], sizes = [1, 1, 96], strides = [1, 1, 1]} : vector<1x8x96xf32> to vector<1x1x96xf32>
    %167 = vector.shape_cast %166 : vector<1x1x96xf32> to vector<1x96xf32>
    %168 = vector.extract_strided_slice %167 {offsets = [0, 0], sizes = [1, 64], strides = [1, 1]} : vector<1x96xf32> to vector<1x64xf32>
    %cst_34 = arith.constant dense<0.000000e+00> : vector<1x64xf32>
    %169 = tpu.matmul %165, %4, %cst_34 {dimension_numbers = #tpu.dot_dimension_numbers<[1], [0], [0], [1], [0, 0, 1, 1], [], []>} : vector<1x32xf32>, vector<32x64xf32>, vector<1x64xf32> -> vector<1x64xf32>
    %170 = arith.addf %168, %169 : vector<1x64xf32>
    %171 = vector.extract_strided_slice %170 {offsets = [0, 0], sizes = [1, 32], strides = [1, 1]} : vector<1x64xf32> to vector<1x32xf32>
    %172 = arith.negf %171 : vector<1x32xf32>
    %173 = math.exp %172 : vector<1x32xf32>
    %cst_35 = arith.constant 1.000000e+00 : f32
    %174 = vector.broadcast %cst_35 : f32 to vector<1x32xf32>
    %175 = arith.addf %174, %173 : vector<1x32xf32>
    %176 = arith.divf %174, %175 : vector<1x32xf32>
    %177 = vector.extract_strided_slice %170 {offsets = [0, 32], sizes = [1, 32], strides = [1, 1]} : vector<1x64xf32> to vector<1x32xf32>
    %178 = arith.negf %177 : vector<1x32xf32>
    %179 = math.exp %178 : vector<1x32xf32>
    %cst_36 = arith.constant 1.000000e+00 : f32
    %180 = vector.broadcast %cst_36 : f32 to vector<1x32xf32>
    %181 = arith.addf %180, %179 : vector<1x32xf32>
    %182 = arith.divf %180, %181 : vector<1x32xf32>
    %183 = vector.extract_strided_slice %167 {offsets = [0, 64], sizes = [1, 32], strides = [1, 1]} : vector<1x96xf32> to vector<1x32xf32>
    %184 = arith.mulf %165, %176 : vector<1x32xf32>
    %cst_37 = arith.constant dense<0.000000e+00> : vector<1x32xf32>
    %185 = tpu.matmul %184, %5, %cst_37 {dimension_numbers = #tpu.dot_dimension_numbers<[1], [0], [0], [1], [0, 0, 1, 1], [], []>} : vector<1x32xf32>, vector<32x32xf32>, vector<1x32xf32> -> vector<1x32xf32>
    %186 = arith.addf %183, %185 : vector<1x32xf32>
    %187 = math.tanh %186 : vector<1x32xf32>
    %188 = arith.mulf %182, %165 : vector<1x32xf32>
    %cst_38 = arith.constant 1.000000e+00 : f32
    %189 = vector.broadcast %cst_38 : f32 to vector<1x32xf32>
    %190 = arith.subf %189, %182 : vector<1x32xf32>
    %191 = arith.mulf %190, %187 : vector<1x32xf32>
    %192 = arith.addf %188, %191 : vector<1x32xf32>
    %193 = vector.extract_strided_slice %0 {offsets = [0, 4, 0], sizes = [1, 1, 32], strides = [1, 1, 1]} : vector<1x8x32xf32> to vector<1x1x32xf32>
    %194 = vector.shape_cast %193 : vector<1x1x32xf32> to vector<1x32xf32>
    %195 = arith.subf %192, %194 : vector<1x32xf32>
    %196 = vector.extract_strided_slice %1 {offsets = [0, 0, 4], sizes = [1, 8, 1], strides = [1, 1, 1]} : vector<1x8x8xf32> to vector<1x8x1xf32>
    %197 = vector.shape_cast %195 : vector<1x32xf32> to vector<1x1x32xf32>
    %198 = vector.broadcast %196 : vector<1x8x1xf32> to vector<1x8x32xf32>
    %199 = vector.broadcast %197 : vector<1x1x32xf32> to vector<1x8x32xf32>
    %200 = arith.mulf %198, %199 : vector<1x8x32xf32>
    %201 = arith.addf %163, %200 : vector<1x8x32xf32>
    %202 = vector.extract_strided_slice %201 {offsets = [0, 5, 0], sizes = [1, 1, 32], strides = [1, 1, 1]} : vector<1x8x32xf32> to vector<1x1x32xf32>
    %203 = vector.shape_cast %202 : vector<1x1x32xf32> to vector<1x32xf32>
    %204 = vector.extract_strided_slice %10 {offsets = [0, 5, 0], sizes = [1, 1, 96], strides = [1, 1, 1]} : vector<1x8x96xf32> to vector<1x1x96xf32>
    %205 = vector.shape_cast %204 : vector<1x1x96xf32> to vector<1x96xf32>
    %206 = vector.extract_strided_slice %205 {offsets = [0, 0], sizes = [1, 64], strides = [1, 1]} : vector<1x96xf32> to vector<1x64xf32>
    %cst_39 = arith.constant dense<0.000000e+00> : vector<1x64xf32>
    %207 = tpu.matmul %203, %4, %cst_39 {dimension_numbers = #tpu.dot_dimension_numbers<[1], [0], [0], [1], [0, 0, 1, 1], [], []>} : vector<1x32xf32>, vector<32x64xf32>, vector<1x64xf32> -> vector<1x64xf32>
    %208 = arith.addf %206, %207 : vector<1x64xf32>
    %209 = vector.extract_strided_slice %208 {offsets = [0, 0], sizes = [1, 32], strides = [1, 1]} : vector<1x64xf32> to vector<1x32xf32>
    %210 = arith.negf %209 : vector<1x32xf32>
    %211 = math.exp %210 : vector<1x32xf32>
    %cst_40 = arith.constant 1.000000e+00 : f32
    %212 = vector.broadcast %cst_40 : f32 to vector<1x32xf32>
    %213 = arith.addf %212, %211 : vector<1x32xf32>
    %214 = arith.divf %212, %213 : vector<1x32xf32>
    %215 = vector.extract_strided_slice %208 {offsets = [0, 32], sizes = [1, 32], strides = [1, 1]} : vector<1x64xf32> to vector<1x32xf32>
    %216 = arith.negf %215 : vector<1x32xf32>
    %217 = math.exp %216 : vector<1x32xf32>
    %cst_41 = arith.constant 1.000000e+00 : f32
    %218 = vector.broadcast %cst_41 : f32 to vector<1x32xf32>
    %219 = arith.addf %218, %217 : vector<1x32xf32>
    %220 = arith.divf %218, %219 : vector<1x32xf32>
    %221 = vector.extract_strided_slice %205 {offsets = [0, 64], sizes = [1, 32], strides = [1, 1]} : vector<1x96xf32> to vector<1x32xf32>
    %222 = arith.mulf %203, %214 : vector<1x32xf32>
    %cst_42 = arith.constant dense<0.000000e+00> : vector<1x32xf32>
    %223 = tpu.matmul %222, %5, %cst_42 {dimension_numbers = #tpu.dot_dimension_numbers<[1], [0], [0], [1], [0, 0, 1, 1], [], []>} : vector<1x32xf32>, vector<32x32xf32>, vector<1x32xf32> -> vector<1x32xf32>
    %224 = arith.addf %221, %223 : vector<1x32xf32>
    %225 = math.tanh %224 : vector<1x32xf32>
    %226 = arith.mulf %220, %203 : vector<1x32xf32>
    %cst_43 = arith.constant 1.000000e+00 : f32
    %227 = vector.broadcast %cst_43 : f32 to vector<1x32xf32>
    %228 = arith.subf %227, %220 : vector<1x32xf32>
    %229 = arith.mulf %228, %225 : vector<1x32xf32>
    %230 = arith.addf %226, %229 : vector<1x32xf32>
    %231 = vector.extract_strided_slice %0 {offsets = [0, 5, 0], sizes = [1, 1, 32], strides = [1, 1, 1]} : vector<1x8x32xf32> to vector<1x1x32xf32>
    %232 = vector.shape_cast %231 : vector<1x1x32xf32> to vector<1x32xf32>
    %233 = arith.subf %230, %232 : vector<1x32xf32>
    %234 = vector.extract_strided_slice %1 {offsets = [0, 0, 5], sizes = [1, 8, 1], strides = [1, 1, 1]} : vector<1x8x8xf32> to vector<1x8x1xf32>
    %235 = vector.shape_cast %233 : vector<1x32xf32> to vector<1x1x32xf32>
    %236 = vector.broadcast %234 : vector<1x8x1xf32> to vector<1x8x32xf32>
    %237 = vector.broadcast %235 : vector<1x1x32xf32> to vector<1x8x32xf32>
    %238 = arith.mulf %236, %237 : vector<1x8x32xf32>
    %239 = arith.addf %201, %238 : vector<1x8x32xf32>
    %240 = vector.extract_strided_slice %239 {offsets = [0, 6, 0], sizes = [1, 1, 32], strides = [1, 1, 1]} : vector<1x8x32xf32> to vector<1x1x32xf32>
    %241 = vector.shape_cast %240 : vector<1x1x32xf32> to vector<1x32xf32>
    %242 = vector.extract_strided_slice %10 {offsets = [0, 6, 0], sizes = [1, 1, 96], strides = [1, 1, 1]} : vector<1x8x96xf32> to vector<1x1x96xf32>
    %243 = vector.shape_cast %242 : vector<1x1x96xf32> to vector<1x96xf32>
    %244 = vector.extract_strided_slice %243 {offsets = [0, 0], sizes = [1, 64], strides = [1, 1]} : vector<1x96xf32> to vector<1x64xf32>
    %cst_44 = arith.constant dense<0.000000e+00> : vector<1x64xf32>
    %245 = tpu.matmul %241, %4, %cst_44 {dimension_numbers = #tpu.dot_dimension_numbers<[1], [0], [0], [1], [0, 0, 1, 1], [], []>} : vector<1x32xf32>, vector<32x64xf32>, vector<1x64xf32> -> vector<1x64xf32>
    %246 = arith.addf %244, %245 : vector<1x64xf32>
    %247 = vector.extract_strided_slice %246 {offsets = [0, 0], sizes = [1, 32], strides = [1, 1]} : vector<1x64xf32> to vector<1x32xf32>
    %248 = arith.negf %247 : vector<1x32xf32>
    %249 = math.exp %248 : vector<1x32xf32>
    %cst_45 = arith.constant 1.000000e+00 : f32
    %250 = vector.broadcast %cst_45 : f32 to vector<1x32xf32>
    %251 = arith.addf %250, %249 : vector<1x32xf32>
    %252 = arith.divf %250, %251 : vector<1x32xf32>
    %253 = vector.extract_strided_slice %246 {offsets = [0, 32], sizes = [1, 32], strides = [1, 1]} : vector<1x64xf32> to vector<1x32xf32>
    %254 = arith.negf %253 : vector<1x32xf32>
    %255 = math.exp %254 : vector<1x32xf32>
    %cst_46 = arith.constant 1.000000e+00 : f32
    %256 = vector.broadcast %cst_46 : f32 to vector<1x32xf32>
    %257 = arith.addf %256, %255 : vector<1x32xf32>
    %258 = arith.divf %256, %257 : vector<1x32xf32>
    %259 = vector.extract_strided_slice %243 {offsets = [0, 64], sizes = [1, 32], strides = [1, 1]} : vector<1x96xf32> to vector<1x32xf32>
    %260 = arith.mulf %241, %252 : vector<1x32xf32>
    %cst_47 = arith.constant dense<0.000000e+00> : vector<1x32xf32>
    %261 = tpu.matmul %260, %5, %cst_47 {dimension_numbers = #tpu.dot_dimension_numbers<[1], [0], [0], [1], [0, 0, 1, 1], [], []>} : vector<1x32xf32>, vector<32x32xf32>, vector<1x32xf32> -> vector<1x32xf32>
    %262 = arith.addf %259, %261 : vector<1x32xf32>
    %263 = math.tanh %262 : vector<1x32xf32>
    %264 = arith.mulf %258, %241 : vector<1x32xf32>
    %cst_48 = arith.constant 1.000000e+00 : f32
    %265 = vector.broadcast %cst_48 : f32 to vector<1x32xf32>
    %266 = arith.subf %265, %258 : vector<1x32xf32>
    %267 = arith.mulf %266, %263 : vector<1x32xf32>
    %268 = arith.addf %264, %267 : vector<1x32xf32>
    %269 = vector.extract_strided_slice %0 {offsets = [0, 6, 0], sizes = [1, 1, 32], strides = [1, 1, 1]} : vector<1x8x32xf32> to vector<1x1x32xf32>
    %270 = vector.shape_cast %269 : vector<1x1x32xf32> to vector<1x32xf32>
    %271 = arith.subf %268, %270 : vector<1x32xf32>
    %272 = vector.extract_strided_slice %1 {offsets = [0, 0, 6], sizes = [1, 8, 1], strides = [1, 1, 1]} : vector<1x8x8xf32> to vector<1x8x1xf32>
    %273 = vector.shape_cast %271 : vector<1x32xf32> to vector<1x1x32xf32>
    %274 = vector.broadcast %272 : vector<1x8x1xf32> to vector<1x8x32xf32>
    %275 = vector.broadcast %273 : vector<1x1x32xf32> to vector<1x8x32xf32>
    %276 = arith.mulf %274, %275 : vector<1x8x32xf32>
    %277 = arith.addf %239, %276 : vector<1x8x32xf32>
    %278 = vector.extract_strided_slice %277 {offsets = [0, 7, 0], sizes = [1, 1, 32], strides = [1, 1, 1]} : vector<1x8x32xf32> to vector<1x1x32xf32>
    %279 = vector.shape_cast %278 : vector<1x1x32xf32> to vector<1x32xf32>
    %280 = vector.extract_strided_slice %10 {offsets = [0, 7, 0], sizes = [1, 1, 96], strides = [1, 1, 1]} : vector<1x8x96xf32> to vector<1x1x96xf32>
    %281 = vector.shape_cast %280 : vector<1x1x96xf32> to vector<1x96xf32>
    %282 = vector.extract_strided_slice %281 {offsets = [0, 0], sizes = [1, 64], strides = [1, 1]} : vector<1x96xf32> to vector<1x64xf32>
    %cst_49 = arith.constant dense<0.000000e+00> : vector<1x64xf32>
    %283 = tpu.matmul %279, %4, %cst_49 {dimension_numbers = #tpu.dot_dimension_numbers<[1], [0], [0], [1], [0, 0, 1, 1], [], []>} : vector<1x32xf32>, vector<32x64xf32>, vector<1x64xf32> -> vector<1x64xf32>
    %284 = arith.addf %282, %283 : vector<1x64xf32>
    %285 = vector.extract_strided_slice %284 {offsets = [0, 0], sizes = [1, 32], strides = [1, 1]} : vector<1x64xf32> to vector<1x32xf32>
    %286 = arith.negf %285 : vector<1x32xf32>
    %287 = math.exp %286 : vector<1x32xf32>
    %cst_50 = arith.constant 1.000000e+00 : f32
    %288 = vector.broadcast %cst_50 : f32 to vector<1x32xf32>
    %289 = arith.addf %288, %287 : vector<1x32xf32>
    %290 = arith.divf %288, %289 : vector<1x32xf32>
    %291 = vector.extract_strided_slice %284 {offsets = [0, 32], sizes = [1, 32], strides = [1, 1]} : vector<1x64xf32> to vector<1x32xf32>
    %292 = arith.negf %291 : vector<1x32xf32>
    %293 = math.exp %292 : vector<1x32xf32>
    %cst_51 = arith.constant 1.000000e+00 : f32
    %294 = vector.broadcast %cst_51 : f32 to vector<1x32xf32>
    %295 = arith.addf %294, %293 : vector<1x32xf32>
    %296 = arith.divf %294, %295 : vector<1x32xf32>
    %297 = vector.extract_strided_slice %281 {offsets = [0, 64], sizes = [1, 32], strides = [1, 1]} : vector<1x96xf32> to vector<1x32xf32>
    %298 = arith.mulf %279, %290 : vector<1x32xf32>
    %cst_52 = arith.constant dense<0.000000e+00> : vector<1x32xf32>
    %299 = tpu.matmul %298, %5, %cst_52 {dimension_numbers = #tpu.dot_dimension_numbers<[1], [0], [0], [1], [0, 0, 1, 1], [], []>} : vector<1x32xf32>, vector<32x32xf32>, vector<1x32xf32> -> vector<1x32xf32>
    %300 = arith.addf %297, %299 : vector<1x32xf32>
    %301 = math.tanh %300 : vector<1x32xf32>
    %302 = arith.mulf %296, %279 : vector<1x32xf32>
    %cst_53 = arith.constant 1.000000e+00 : f32
    %303 = vector.broadcast %cst_53 : f32 to vector<1x32xf32>
    %304 = arith.subf %303, %296 : vector<1x32xf32>
    %305 = arith.mulf %304, %301 : vector<1x32xf32>
    %306 = arith.addf %302, %305 : vector<1x32xf32>
    %307 = vector.shape_cast %40 : vector<1x32xf32> to vector<1x1x32xf32>
    %308 = vector.shape_cast %78 : vector<1x32xf32> to vector<1x1x32xf32>
    %309 = vector.shape_cast %116 : vector<1x32xf32> to vector<1x1x32xf32>
    %310 = vector.shape_cast %154 : vector<1x32xf32> to vector<1x1x32xf32>
    %311 = vector.shape_cast %192 : vector<1x32xf32> to vector<1x1x32xf32>
    %312 = vector.shape_cast %230 : vector<1x32xf32> to vector<1x1x32xf32>
    %313 = vector.shape_cast %268 : vector<1x32xf32> to vector<1x1x32xf32>
    %314 = vector.shape_cast %306 : vector<1x32xf32> to vector<1x1x32xf32>
    %315 = tpu.concatenate %307, %308, %309, %310, %311, %312, %313, %314 in 1 : vector<1x1x32xf32>, vector<1x1x32xf32>, vector<1x1x32xf32>, vector<1x1x32xf32>, vector<1x1x32xf32>, vector<1x1x32xf32>, vector<1x1x32xf32>, vector<1x1x32xf32> -> vector<1x8x32xf32>
    %316 = vector.shape_cast %315 : vector<1x8x32xf32> to vector<1x1x256xf32>
    %c0_54 = arith.constant 0 : index
    %c0_55 = arith.constant 0 : index
    %c0_56 = arith.constant 0 : index
    %317 = vector.load %arg7[%c0_54, %c0_55, %c0_56] : memref<1x1x256xf32, #tpu.memory_space<vmem>>, vector<1x1x256xf32>
    tpu.vector_store %arg7[%c0_54, %c0_55, %c0_56], %316 {strides = array<i32>} : memref<1x1x256xf32, #tpu.memory_space<vmem>>, vector<1x1x256xf32>,
    return
  }
  func.func @transform_0(%arg0: i32) -> (i32, i32, i32) {
    %c0_i32 = arith.constant 0 : i32
    %c0_i32_0 = arith.constant 0 : i32
    %c0_i32_1 = arith.constant 0 : i32
    return %arg0, %c0_i32, %c0_i32_0 : i32, i32, i32
  }
  func.func @transform_1(%arg0: i32) -> (i32, i32, i32) {
    %c0_i32 = arith.constant 0 : i32
    %c0_i32_0 = arith.constant 0 : i32
    %c0_i32_1 = arith.constant 0 : i32
    return %arg0, %c0_i32, %c0_i32_0 : i32, i32, i32
  }
  func.func @transform_2(%arg0: i32) -> (i32, i32) {
    %c0_i32 = arith.constant 0 : i32
    %c0_i32_0 = arith.constant 0 : i32
    %c0_i32_1 = arith.constant 0 : i32
    return %c0_i32, %c0_i32_0 : i32, i32
  }
  func.func @transform_3(%arg0: i32) -> (i32, i32) {
    %c0_i32 = arith.constant 0 : i32
    %c0_i32_0 = arith.constant 0 : i32
    %c0_i32_1 = arith.constant 0 : i32
    return %c0_i32, %c0_i32_0 : i32, i32
  }
  func.func @transform_4(%arg0: i32) -> (i32, i32) {
    %c0_i32 = arith.constant 0 : i32
    %c0_i32_0 = arith.constant 0 : i32
    %c0_i32_1 = arith.constant 0 : i32
    return %c0_i32, %c0_i32_0 : i32, i32
  }
  func.func @transform_5(%arg0: i32) -> (i32, i32) {
    %c0_i32 = arith.constant 0 : i32
    %c0_i32_0 = arith.constant 0 : i32
    %c0_i32_1 = arith.constant 0 : i32
    return %c0_i32, %c0_i32_0 : i32, i32
  }
  func.func @transform_6(%arg0: i32) -> (i32, i32, i32) {
    %c0_i32 = arith.constant 0 : i32
    %c0_i32_0 = arith.constant 0 : i32
    %c0_i32_1 = arith.constant 0 : i32
    return %arg0, %c0_i32, %c0_i32_0 : i32, i32, i32
  }
}

</mosaic_0001>

<llo_original>
// kernel: tpu_custom_call.1
$region0: #{tpu_custom_call.1}
  #allocation0 [shape = 'u32[]', space=smem, size = 0x4, offset = 0x4, fixed_abs, tag = 'smem constant byte address 0x4 - core index']
  #allocation1 [shape = 'u32[144,128]{1,0:T(1,128)}', space=vmem, size = 0x12000, scoped, tag = 'internal scratch']
  %s0 = inlined_call_operand.hbm [shape: f32[2,8,32], index: 0, kind: input, shape index: {}]
  %s1 = inlined_call_operand.hbm [shape: f32[2,8,8], index: 1, kind: input, shape index: {}]
  %s2 = inlined_call_operand.hbm [shape: f32[32,96], index: 2, kind: input, shape index: {}]
  %s3 = inlined_call_operand.vmem [shape: f32[1,96], index: 3, kind: input, shape index: {}]
  %s4 = inlined_call_operand.hbm [shape: f32[32,64], index: 4, kind: input, shape index: {}]
  %s5 = inlined_call_operand.hbm [shape: f32[32,32], index: 5, kind: input, shape index: {}]
  %s6 = inlined_call_operand.hbm [shape: f32[2,1,256], index: 6, kind: output, shape index: {}]
  %s7 = sld [smem:[#allocation0]]
  $region77: #{tpu_custom_call.1} parent=0
    _
  %s9 = ssub.s32 1, %s7
  %s10 = scalar_select 0, %s9, %s7
  $region1: #{tpu_custom_call.1} parent=0
    #allocation2 [shape = 'u8[8192]{0}', space=vmem, size = 0x2000, scoped, tag = 'input window, operand 0']
    #allocation3 [shape = 's32[2]{0}', space=sflag, size = 0x8, scoped, tag = 'scoped memory for tpu_custom_call.1']
    #allocation4 [shape = 's32[2]{0}', space=sflag, size = 0x8, scoped, tag = 'scoped memory for tpu_custom_call.1']
    #allocation5 [shape = 'u8[8192]{0}', space=vmem, size = 0x2000, scoped, tag = 'input window, operand 1']
    #allocation6 [shape = 's32[2]{0}', space=sflag, size = 0x8, scoped, tag = 'scoped memory for tpu_custom_call.1']
    #allocation7 [shape = 'u8[16384]{0}', space=vmem, size = 0x4000, scoped, tag = 'input window, operand 2, single buffered']
    #allocation8 [shape = 'u8[16384]{0}', space=vmem, size = 0x4000, scoped, tag = 'input window, operand 4, single buffered']
    #allocation9 [shape = 's32[1]{0}', space=sflag, size = 0x4, scoped, tag = 'scoped memory for tpu_custom_call.1']
    #allocation10 [shape = 'u8[16384]{0}', space=vmem, size = 0x4000, scoped, tag = 'input window, operand 5, single buffered']
    #allocation11 [shape = 'u8[2048]{0}', space=vmem, size = 0x800, scoped, tag = 'output window, operand 0']
    %11 = vsyncpa [#allocation3], 0
    %s12 = scalar_lea.sflag [#allocation3], 1
    %13 = vsyncpa %s12, 0
    %14 = vsyncpa [#allocation6], 0
    %s15 = scalar_lea.sflag [#allocation6], 1
    %16 = vsyncpa %s15, 0
    %17 = vsyncpa [#allocation9], 0
    %18 = vsyncpa [#allocation4], 0
    %s19 = scalar_lea.sflag [#allocation4], 1
    %20 = vsyncpa %s19, 0
    loop: start=0, step=1, limit=4
    $region2: #{tpu_custom_call.1} parent=1 // loop_pre_header
      _
    $region3: #{tpu_custom_call.1} parent=1 // loop_header
      %s22 = sphi 0, %s26
      %p23 = scmp.ge.s32.totalorder %s22, 4
      %s32 = sphi 0, %s34
      %s35 = sphi 0, %s32
      %s36 = sphi 0, %s35
      %s52 = sphi 0, %s36
      %s58 = sphi 0, %s60
      %s61 = sphi 0, %s58
      %s62 = sphi 0, %s61
      %s78 = sphi 0, %s62
      %s82 = sphi 0, %s82
      %s84 = sphi 0, %s82
      %s85 = sphi 0, %s84
      %s99 = sphi 0, %s85
      %s103 = sphi 0, %s103
      %s105 = sphi 0, %s103
      %s106 = sphi 0, %s105
      %s120 = sphi 0, %s106
      %s124 = sphi 0, %s124
      %s126 = sphi 0, %s124
      %s127 = sphi 0, %s126
      %s141 = sphi 0, %s127
      %s145 = sphi 0, %s145
      %s147 = sphi 0, %s145
      %s148 = sphi 0, %s147
      %s162 = sphi 0, %s148
      %s168 = sphi 0, %s170
      %s171 = sphi 0, %s168
      %s172 = sphi 0, %s171
      %s188 = sphi 0, %s172
    $region4: #{tpu_custom_call.1} parent=1 // loop_header_branch
      %25 = sbr.rel (%p23) target = $region8
    $region5: #{tpu_custom_call.1} parent=1 // loop_body
      %s27 = ssub.s32 %s22, 1
      %s28 = ssub.s32 %s22, 2
      %s29 = sadd.s32 %s22, 1
      %s30 = ssub.s32 %s22, %s29
      %p31 = scmp.eq.s32.totalorder %s30, 0
      %s33 = sadd.s32 %s32, 1
      %s34 = scalar_select %p31, %s32, %s33
      %p37 = pneg %p31
      %p38 = scmp.eq.s32.totalorder %s22, 1
      %p39 = por %p37, %p38
      %p40 = scmp.ne.s32.totalorder %s32, %s35
      %p41 = scmp.eq.s32.totalorder %s22, 0
      %p42 = por %p40, %p41
      %p43 = scmp.ne.s32.totalorder %s32, %s35
      %p44 = scmp.eq.s32.totalorder %s27, 1
      %p45 = por %p43, %p44
      %p46 = scmp.ne.s32.totalorder %s35, %s36
      %p47 = scmp.eq.s32.totalorder %s27, 0
      %p48 = por %p46, %p47
      %p49 = scmp.ne.s32.totalorder %s35, %s36
      %p50 = scmp.eq.s32.totalorder %s28, 1
      %p51 = por %p49, %p50
      %p53 = scmp.ne.s32.totalorder %s36, %s52
      %p54 = scmp.eq.s32.totalorder %s28, 0
      %p55 = por %p53, %p54
      %s56 = ssub.s32 %s22, %s29
      %p57 = scmp.eq.s32.totalorder %s56, 0
      %s59 = sadd.s32 %s58, 1
      %s60 = scalar_select %p57, %s58, %s59
      %p63 = pneg %p57
      %p64 = scmp.eq.s32.totalorder %s22, 1
      %p65 = por %p63, %p64
      %p66 = scmp.ne.s32.totalorder %s58, %s61
      %p67 = scmp.eq.s32.totalorder %s22, 0
      %p68 = por %p66, %p67
      %p69 = scmp.ne.s32.totalorder %s58, %s61
      %p70 = scmp.eq.s32.totalorder %s27, 1
      %p71 = por %p69, %p70
      %p72 = scmp.ne.s32.totalorder %s61, %s62
      %p73 = scmp.eq.s32.totalorder %s27, 0
      %p74 = por %p72, %p73
      %p75 = scmp.ne.s32.totalorder %s61, %s62
      %p76 = scmp.eq.s32.totalorder %s28, 1
      %p77 = por %p75, %p76
      %p79 = scmp.ne.s32.totalorder %s62, %s78
      %p80 = scmp.eq.s32.totalorder %s28, 0
      %p81 = por %p79, %p80
      %s83 = sadd.s32 %s82, 1
      %p86 = scmp.eq.s32.totalorder %s22, 1
      %p87 = scmp.ne.s32.totalorder %s82, %s84
      %p88 = scmp.eq.s32.totalorder %s22, 0
      %p89 = por %p87, %p88
      %p90 = scmp.ne.s32.totalorder %s82, %s84
      %p91 = scmp.eq.s32.totalorder %s27, 1
      %p92 = por %p90, %p91
      %p93 = scmp.ne.s32.totalorder %s84, %s85
      %p94 = scmp.eq.s32.totalorder %s27, 0
      %p95 = por %p93, %p94
      %p96 = scmp.ne.s32.totalorder %s84, %s85
      %p97 = scmp.eq.s32.totalorder %s28, 1
      %p98 = por %p96, %p97
      %p100 = scmp.ne.s32.totalorder %s85, %s99
      %p101 = scmp.eq.s32.totalorder %s28, 0
      %p102 = por %p100, %p101
      %s104 = sadd.s32 %s103, 1
      %p107 = scmp.eq.s32.totalorder %s22, 1
      %p108 = scmp.ne.s32.totalorder %s103, %s105
      %p109 = scmp.eq.s32.totalorder %s22, 0
      %p110 = por %p108, %p109
      %p111 = scmp.ne.s32.totalorder %s103, %s105
      %p112 = scmp.eq.s32.totalorder %s27, 1
      %p113 = por %p111, %p112
      %p114 = scmp.ne.s32.totalorder %s105, %s106
      %p115 = scmp.eq.s32.totalorder %s27, 0
      %p116 = por %p114, %p115
      %p117 = scmp.ne.s32.totalorder %s105, %s106
      %p118 = scmp.eq.s32.totalorder %s28, 1
      %p119 = por %p117, %p118
      %p121 = scmp.ne.s32.totalorder %s106, %s120
      %p122 = scmp.eq.s32.totalorder %s28, 0
      %p123 = por %p121, %p122
      %s125 = sadd.s32 %s124, 1
      %p128 = scmp.eq.s32.totalorder %s22, 1
      %p129 = scmp.ne.s32.totalorder %s124, %s126
      %p130 = scmp.eq.s32.totalorder %s22, 0
      %p131 = por %p129, %p130
      %p132 = scmp.ne.s32.totalorder %s124, %s126
      %p133 = scmp.eq.s32.totalorder %s27, 1
      %p134 = por %p132, %p133
      %p135 = scmp.ne.s32.totalorder %s126, %s127
      %p136 = scmp.eq.s32.totalorder %s27, 0
      %p137 = por %p135, %p136
      %p138 = scmp.ne.s32.totalorder %s126, %s127
      %p139 = scmp.eq.s32.totalorder %s28, 1
      %p140 = por %p138, %p139
      %p142 = scmp.ne.s32.totalorder %s127, %s141
      %p143 = scmp.eq.s32.totalorder %s28, 0
      %p144 = por %p142, %p143
      %s146 = sadd.s32 %s145, 1
      %p149 = scmp.eq.s32.totalorder %s22, 1
      %p150 = scmp.ne.s32.totalorder %s145, %s147
      %p151 = scmp.eq.s32.totalorder %s22, 0
      %p152 = por %p150, %p151
      %p153 = scmp.ne.s32.totalorder %s145, %s147
      %p154 = scmp.eq.s32.totalorder %s27, 1
      %p155 = por %p153, %p154
      %p156 = scmp.ne.s32.totalorder %s147, %s148
      %p157 = scmp.eq.s32.totalorder %s27, 0
      %p158 = por %p156, %p157
      %p159 = scmp.ne.s32.totalorder %s147, %s148
      %p160 = scmp.eq.s32.totalorder %s28, 1
      %p161 = por %p159, %p160
      %p163 = scmp.ne.s32.totalorder %s148, %s162
      %p164 = scmp.eq.s32.totalorder %s28, 0
      %p165 = por %p163, %p164
      %s166 = ssub.s32 %s22, %s29
      %p167 = scmp.eq.s32.totalorder %s166, 0
      %s169 = sadd.s32 %s168, 1
      %s170 = scalar_select %p167, %s168, %s169
      %p173 = pneg %p167
      %p174 = scmp.eq.s32.totalorder %s22, 1
      %p175 = por %p173, %p174
      %p176 = scmp.ne.s32.totalorder %s168, %s171
      %p177 = scmp.eq.s32.totalorder %s22, 0
      %p178 = por %p176, %p177
      %p179 = scmp.ne.s32.totalorder %s168, %s171
      %p180 = scmp.eq.s32.totalorder %s27, 1
      %p181 = por %p179, %p180
      %p182 = scmp.ne.s32.totalorder %s171, %s172
      %p183 = scmp.eq.s32.totalorder %s27, 0
      %p184 = por %p182, %p183
      %p185 = scmp.ne.s32.totalorder %s171, %s172
      %p186 = scmp.eq.s32.totalorder %s28, 1
      %p187 = por %p185, %p186
      %p189 = scmp.ne.s32.totalorder %s172, %s188
      %p190 = scmp.eq.s32.totalorder %s28, 0
      %p191 = por %p189, %p190
      %p192 = scmp.le.s32.totalorder 1, %s22
      %p193 = scmp.lt.s32.totalorder %s22, 3
      %p194 = pnand %p192, %p193
      %p195 = pneg %p194
      // Predicated region
      $region9: #{tpu_custom_call.1} parent=5 // pred_check
        _
      $region10: #{tpu_custom_call.1} parent=5 // pred_check_branch
        %197 = sbr.rel (%p194) target = $region12
      $region11: #{tpu_custom_call.1} parent=5 // pred_region
        %s198 = ssub.s32 %s22, 1
        // Predicated region
        $region13: #{tpu_custom_call.1} parent=11 // pred_check
          %p199 = pneg %p95
        $region14: #{tpu_custom_call.1} parent=11 // pred_check_branch
          %201 = sbr.rel (%p199) target = $region16
        $region15: #{tpu_custom_call.1} parent=11 // pred_region
          %s203 = ssub.s32 512, 512
          %204 = vsyncadd [#allocation6], %s203
          %s205 = sshll.u32 [#allocation7], 4
          %s206 = int_to_ptr.vmem [resolvable:$true] %s205
          %211 = dma.hbm_to_vmem [thread:$0]  %s2, 512, %s206, [#allocation6], 128, 128, 8
        $region16: #{tpu_custom_call.1} parent=11 // pred_fallthru
          _
        // Predicated region
        $region17: #{tpu_custom_call.1} parent=11 // pred_check
          %p212 = pneg %p116
        $region18: #{tpu_custom_call.1} parent=11 // pred_check_branch
          %214 = sbr.rel (%p212) target = $region20
        $region19: #{tpu_custom_call.1} parent=11 // pred_region
          _
        $region20: #{tpu_custom_call.1} parent=11 // pred_fallthru
          _
        // Predicated region
        $region21: #{tpu_custom_call.1} parent=11 // pred_check
          %p215 = pneg %p137
        $region22: #{tpu_custom_call.1} parent=11 // pred_check_branch
          %217 = sbr.rel (%p215) target = $region24
        $region23: #{tpu_custom_call.1} parent=11 // pred_region
          %s219 = ssub.s32 512, 512
          %220 = vsyncadd [#allocation9], %s219
          %s221 = sshll.u32 [#allocation8], 4
          %s222 = int_to_ptr.vmem [resolvable:$true] %s221
          %227 = dma.hbm_to_vmem [thread:$0]  %s4, 512, %s222, [#allocation9], 128, 128, 8
        $region24: #{tpu_custom_call.1} parent=11 // pred_fallthru
          _
        // Predicated region
        $region25: #{tpu_custom_call.1} parent=11 // pred_check
          %p228 = pneg %p158
        $region26: #{tpu_custom_call.1} parent=11 // pred_check_branch
          %230 = sbr.rel (%p228) target = $region28
        $region27: #{tpu_custom_call.1} parent=11 // pred_region
          %s232 = ssub.s32 512, 512
          %233 = vsyncadd [#allocation9], %s232
          %s234 = sshll.u32 [#allocation10], 4
          %s235 = int_to_ptr.vmem [resolvable:$true] %s234
          %240 = dma.hbm_to_vmem [thread:$0]  %s5, 512, %s235, [#allocation9], 128, 128, 8
        $region28: #{tpu_custom_call.1} parent=11 // pred_fallthru
          _
      $region12: #{tpu_custom_call.1} parent=5 // pred_fallthru
        _
      %p241 = scmp.lt.s32.totalorder %s22, 2
      // Predicated region
      $region29: #{tpu_custom_call.1} parent=5 // pred_check
        %p242 = pneg %p241
      $region30: #{tpu_custom_call.1} parent=5 // pred_check_branch
        %244 = sbr.rel (%p242) target = $region32
      $region31: #{tpu_custom_call.1} parent=5 // pred_region
        // Predicated region
        $region33: #{tpu_custom_call.1} parent=31 // pred_check
          %p245 = pneg %p42
        $region34: #{tpu_custom_call.1} parent=31 // pred_check_branch
          %247 = sbr.rel (%p245) target = $region36
        $region35: #{tpu_custom_call.1} parent=31 // pred_region
          %s248 = sand.u32 %s32, 1
          %s249 = scalar_lea.sflag [#allocation3], %s248
          %s250 = sand.u32 %s32, 1
          %s251 = smul.addr %s250, 8
          %s252 = scalar_lea.vmem [#allocation2], %s251
          %s254 = ssub.s32 128, 128
          %255 = vsyncadd %s249, %s254
          %s256 = smul.addr %s22, 128
          %s257 = scalar_lea.hbm %s0, %s256
          %s259 = sshll.u32 %s252, 4
          %s260 = int_to_ptr.vmem [resolvable:$true] %s259
          %262 = dma.hbm_to_vmem [thread:$0]  %s257, 128, %s260, %s249
        $region36: #{tpu_custom_call.1} parent=31 // pred_fallthru
          _
        // Predicated region
        $region37: #{tpu_custom_call.1} parent=31 // pred_check
          %p263 = pneg %p68
        $region38: #{tpu_custom_call.1} parent=31 // pred_check_branch
          %265 = sbr.rel (%p263) target = $region40
        $region39: #{tpu_custom_call.1} parent=31 // pred_region
          %s266 = sand.u32 %s22, 1
          %s267 = scalar_lea.sflag [#allocation6], %s266
          %s268 = sand.u32 %s58, 1
          %s269 = smul.addr %s268, 8
          %s270 = scalar_lea.vmem [#allocation5], %s269
          %s272 = ssub.s32 128, 128
          %273 = vsyncadd %s267, %s272
          %s274 = smul.addr %s22, 128
          %s275 = scalar_lea.hbm %s1, %s274
          %s277 = sshll.u32 %s270, 4
          %s278 = int_to_ptr.vmem [resolvable:$true] %s277
          %280 = dma.hbm_to_vmem [thread:$0]  %s275, 128, %s278, %s267
        $region40: #{tpu_custom_call.1} parent=31 // pred_fallthru
          _
      $region32: #{tpu_custom_call.1} parent=5 // pred_fallthru
        _
      %p281 = scmp.le.s32.totalorder 1, %s22
      %p282 = scmp.lt.s32.totalorder %s22, 3
      %p283 = pnand %p281, %p282
      %p284 = pneg %p283
      // Predicated region
      $region41: #{tpu_custom_call.1} parent=5 // pred_check
        _
      $region42: #{tpu_custom_call.1} parent=5 // pred_check_branch
        %286 = sbr.rel (%p283) target = $region44
      $region43: #{tpu_custom_call.1} parent=5 // pred_region
        %s287 = ssub.s32 %s22, 1
        %s288 = sand.u32 %s35, 1
        %s289 = scalar_lea.sflag [#allocation3], %s288
        %s290 = sand.u32 %s35, 1
        %s291 = smul.addr %s290, 8
        %s292 = scalar_lea.vmem [#allocation2], %s291
        // Predicated region
        $region45: #{tpu_custom_call.1} parent=43 // pred_check
          %p293 = pneg %p48
        $region46: #{tpu_custom_call.1} parent=43 // pred_check_branch
          %295 = sbr.rel (%p293) target = $region48
        $region47: #{tpu_custom_call.1} parent=43 // pred_region
          %296 = dma.done %s289, 128
        $region48: #{tpu_custom_call.1} parent=43 // pred_fallthru
          _
        %s297 = sand.u32 %s27, 1
        %s298 = scalar_lea.sflag [#allocation6], %s297
        %s299 = sand.u32 %s61, 1
        %s300 = smul.addr %s299, 8
        %s301 = scalar_lea.vmem [#allocation5], %s300
        // Predicated region
        $region49: #{tpu_custom_call.1} parent=43 // pred_check
          %p302 = pneg %p74
        $region50: #{tpu_custom_call.1} parent=43 // pred_check_branch
          %304 = sbr.rel (%p302) target = $region52
        $region51: #{tpu_custom_call.1} parent=43 // pred_region
          %305 = dma.done %s298, 128
        $region52: #{tpu_custom_call.1} parent=43 // pred_fallthru
          _
        // Predicated region
        $region53: #{tpu_custom_call.1} parent=43 // pred_check
          %p306 = pneg %p95
        $region54: #{tpu_custom_call.1} parent=43 // pred_check_branch
          %308 = sbr.rel (%p306) target = $region56
        $region55: #{tpu_custom_call.1} parent=43 // pred_region
          %309 = dma.done [#allocation6], 512
        $region56: #{tpu_custom_call.1} parent=43 // pred_fallthru
          _
        // Predicated region
        $region57: #{tpu_custom_call.1} parent=43 // pred_check
          %p310 = pneg %p137
        $region58: #{tpu_custom_call.1} parent=43 // pred_check_branch
          %312 = sbr.rel (%p310) target = $region60
        $region59: #{tpu_custom_call.1} parent=43 // pred_region
          %313 = dma.done [#allocation9], 512
        $region60: #{tpu_custom_call.1} parent=43 // pred_fallthru
          _
        // Predicated region
        $region61: #{tpu_custom_call.1} parent=43 // pred_check
          %p314 = pneg %p158
        $region62: #{tpu_custom_call.1} parent=43 // pred_check_branch
          %316 = sbr.rel (%p314) target = $region64
        $region63: #{tpu_custom_call.1} parent=43 // pred_region
          %317 = dma.done [#allocation9], 512
        $region64: #{tpu_custom_call.1} parent=43 // pred_fallthru
          _
        %s318 = sand.u32 %s35, 1
        %s319 = scalar_lea.sflag [#allocation3], %s318
        %s320 = sand.u32 %s35, 1
        %s321 = smul.addr %s320, 8
        %s322 = scalar_lea.vmem [#allocation2], %s321
        %p323 = pneg %p48
        %p324 = pneg %p45
        %s325 = sand.u32 %s27, 1
        %s326 = scalar_lea.sflag [#allocation6], %s325
        %s327 = sand.u32 %s61, 1
        %s328 = smul.addr %s327, 8
        %s329 = scalar_lea.vmem [#allocation5], %s328
        %p330 = pneg %p74
        %p331 = pneg %p71
        %p332 = pneg %p95
        %p333 = pneg %p92
        %p334 = pneg %p116
        %p335 = pneg %p113
        %p336 = pneg %p137
        %p337 = pneg %p134
        %p338 = pneg %p158
        %p339 = pneg %p155
        %p340 = pneg %p184
        %p341 = pneg %p181
        %s342 = sand.u32 %s171, 1
        %s343 = scalar_lea.sflag [#allocation4], %s342
        %s344 = sand.u32 %s171, 1
        %s345 = smul.addr %s344, 2
        %s346 = scalar_lea.vmem [#allocation11], %s345
        %v347 = vld [vmem:[%s292] sm:$0xff]
        %v348 = vld [vmem:[%s301] sm:$0xff]
        %v349 = vld [vmem:[#allocation7] sm:$0xff]
        %v350 = vld [vmem:[#allocation7 + $0x8] sm:$0xff]
        %v351 = vld [vmem:[#allocation7 + $0x10] sm:$0xff]
        %v352 = vld [vmem:[#allocation7 + $0x18] sm:$0xff]
        %v353 = vld [vmem:[%s3] sm:$0x1]
        %v354 = vld [vmem:[#allocation8] sm:$0xff]
        %v355 = vld [vmem:[#allocation8 + $0x8] sm:$0xff]
        %v356 = vld [vmem:[#allocation8 + $0x10] sm:$0xff]
        %v357 = vld [vmem:[#allocation8 + $0x18] sm:$0xff]
        %v358 = vld [vmem:[#allocation10] sm:$0xff]
        %v359 = vld [vmem:[#allocation10 + $0x8] sm:$0xff]
        %v360 = vld [vmem:[#allocation10 + $0x10] sm:$0xff]
        %v361 = vld [vmem:[#allocation10 + $0x18] sm:$0xff]
        %v363 = vlaneseq
        %v364 = vshrl.u32 %v363, 7
        %v365 = vsub.s32 0, %v364
        %v366 = vrot.slane %v353, %v365
        %vm368 = vcmask 261120
        %v370 = vsel %vm368, %v347, 0
        %372 = vmatprep.subr.mxu0 0.0
        %373 = vmatpush1.msra.mxu0 %v349
        %374 = vmatprep.subr.mxu0 0.0
        %375 = vmatpush1.msra.mxu0 %v350
        %376 = vmatprep.subr.mxu0 0.0
        %377 = vmatpush1.msra.mxu0 %v351
        %378 = vmatprep.subr.mxu0 0.0
        %379 = vmatpush1.msra.mxu0 %v352
        %380 = vmatprep.subr.mxu0 0.0
        %381 = vmatpush1.msra.mxu0 0.0
        %382 = vmatprep.subr.mxu0 0.0
        %383 = vmatpush1.msra.mxu0 0.0
        %384 = vmatprep.subr.mxu0 0.0
        %385 = vmatpush1.msra.mxu0 0.0
        %386 = vmatprep.subr.mxu0 0.0
        %387 = vmatpush1.msra.mxu0 0.0
        %388 = vmatprep.subr.mxu0 0.0
        %389 = vmatpush1.msra.mxu0 0.0
        %390 = vmatprep.subr.mxu0 0.0
        %391 = vmatpush1.msra.mxu0 0.0
        %392 = vmatprep.subr.mxu0 0.0
        %393 = vmatpush1.msra.mxu0 0.0
        %394 = vmatprep.subr.mxu0 0.0
        %395 = vmatpush1.msra.mxu0 0.0
        %396 = vmatprep.subr.mxu0 0.0
        %397 = vmatpush1.msra.mxu0 0.0
        %398 = vmatprep.subr.mxu0 0.0
        %399 = vmatpush1.msra.mxu0 0.0
        %400 = vmatprep.subr.mxu0 0.0
        %401 = vmatpush1.msra.mxu0 0.0
        %402 = vmatprep.subr.mxu0 0.0
        %403 = vmatpush1.msra.mxu0 0.0
        %404 = vmatprep.subr.mxu0 0.0
        %405 = vmatpush1.msra.mxu0 0.0
        %406 = vmatprep.subr.mxu0 0.0
        %407 = vmatpush1.msra.mxu0 0.0
        %408 = vmatprep.subr.mxu0 0.0
        %409 = vmatpush1.msra.mxu0 0.0
        %410 = vmatprep.subr.mxu0 0.0
        %411 = vmatpush1.msra.mxu0 0.0
        %412 = vmatprep.subr.mxu0 0.0
        %413 = vmatpush1.msra.mxu0 0.0
        %414 = vmatprep.subr.mxu0 0.0
        %415 = vmatpush1.msra.mxu0 0.0
        %416 = vmatprep.subr.mxu0 0.0
        %417 = vmatpush1.msra.mxu0 0.0
        %418 = vmatprep.subr.mxu0 0.0
        %419 = vmatpush1.msra.mxu0 0.0
        %420 = vmatprep.subr.mxu0 0.0
        %421 = vmatpush1.msra.mxu0 0.0
        %422 = vmatprep.subr.mxu0 0.0
        %423 = vmatpush1.msra.mxu0 0.0
        %424 = vmatprep.subr.mxu0 0.0
        %425 = vmatpush1.msra.mxu0 0.0
        %426 = vmatprep.subr.mxu0 0.0
        %427 = vmatpush1.msra.mxu0 0.0
        %428 = vmatprep.subr.mxu0 0.0
        %429 = vmatpush1.msra.mxu0 0.0
        %430 = vmatprep.subr.mxu0 0.0
        %431 = vmatpush1.msra.mxu0 0.0
        %432 = vmatprep.subr.mxu0 0.0
        %433 = vmatpush1.msra.mxu0 0.0
        %434 = vmatprep.subr.mxu0 0.0
        %435 = vmatpush1.msra.mxu0 0.0
        %436 = vmatprep.mubr.f32.mxu0 0.0
        %437 = vmatmul.mubr.f32.gmra.mrb[0].mxu0 %v370
        %v438 = vpop.f32.mrb[0].mxu0
        %v439 = vadd.f32 %v366, %v438
        %v440 = vpop.f32.mrb[0].mxu0
        %441 = vdwg.mxu0
        %vm442 = vcmask 64512
        %v444 = vsel %vm442, %v348, 0
        %446 = vmatprep.subr.mxu0 0.0
        %447 = vmatpush1.msra.mxu0 %v347
        %448 = vmatprep.subr.mxu0 0.0
        %449 = vmatpush1.msra.mxu0 0.0
        %450 = vmatprep.subr.mxu0 0.0
        %451 = vmatpush1.msra.mxu0 0.0
        %452 = vmatprep.subr.mxu0 0.0
        %453 = vmatpush1.msra.mxu0 0.0
        %454 = vmatprep.subr.mxu0 0.0
        %455 = vmatpush1.msra.mxu0 0.0
        %456 = vmatprep.subr.mxu0 0.0
        %457 = vmatpush1.msra.mxu0 0.0
        %458 = vmatprep.subr.mxu0 0.0
        %459 = vmatpush1.msra.mxu0 0.0
        %460 = vmatprep.subr.mxu0 0.0
        %461 = vmatpush1.msra.mxu0 0.0
        %462 = vmatprep.subr.mxu0 0.0
        %463 = vmatpush1.msra.mxu0 0.0
        %464 = vmatprep.subr.mxu0 0.0
        %465 = vmatpush1.msra.mxu0 0.0
        %466 = vmatprep.subr.mxu0 0.0
        %467 = vmatpush1.msra.mxu0 0.0
        %468 = vmatprep.subr.mxu0 0.0
        %469 = vmatpush1.msra.mxu0 0.0
        %470 = vmatprep.subr.mxu0 0.0
        %471 = vmatpush1.msra.mxu0 0.0
        %472 = vmatprep.subr.mxu0 0.0
        %473 = vmatpush1.msra.mxu0 0.0
        %474 = vmatprep.subr.mxu0 0.0
        %475 = vmatpush1.msra.mxu0 0.0
        %476 = vmatprep.subr.mxu0 0.0
        %477 = vmatpush1.msra.mxu0 0.0
        %478 = vmatprep.subr.mxu0 0.0
        %479 = vmatpush1.msra.mxu0 0.0
        %480 = vmatprep.subr.mxu0 0.0
        %481 = vmatpush1.msra.mxu0 0.0
        %482 = vmatprep.subr.mxu0 0.0
        %483 = vmatpush1.msra.mxu0 0.0
        %484 = vmatprep.subr.mxu0 0.0
        %485 = vmatpush1.msra.mxu0 0.0
        %486 = vmatprep.subr.mxu0 0.0
        %487 = vmatpush1.msra.mxu0 0.0
        %488 = vmatprep.subr.mxu0 0.0
        %489 = vmatpush1.msra.mxu0 0.0
        %490 = vmatprep.subr.mxu0 0.0
        %491 = vmatpush1.msra.mxu0 0.0
        %492 = vmatprep.subr.mxu0 0.0
        %493 = vmatpush1.msra.mxu0 0.0
        %494 = vmatprep.subr.mxu0 0.0
        %495 = vmatpush1.msra.mxu0 0.0
        %496 = vmatprep.subr.mxu0 0.0
        %497 = vmatpush1.msra.mxu0 0.0
        %498 = vmatprep.subr.mxu0 0.0
        %499 = vmatpush1.msra.mxu0 0.0
        %500 = vmatprep.subr.mxu0 0.0
        %501 = vmatpush1.msra.mxu0 0.0
        %502 = vmatprep.subr.mxu0 0.0
        %503 = vmatpush1.msra.mxu0 0.0
        %504 = vmatprep.subr.mxu0 0.0
        %505 = vmatpush1.msra.mxu0 0.0
        %506 = vmatprep.subr.mxu0 0.0
        %507 = vmatpush1.msra.mxu0 0.0
        %508 = vmatprep.subr.mxu0 0.0
        %509 = vmatpush1.msra.mxu0 0.0
        %510 = vmatprep.mubr.f32.mxu0 0.0
        %511 = vmatmul.mubr.f32.gmra.mrb[0].mxu0 %v444
        %v512 = vpop.f32.mrb[0].mxu0
        %v513 = vadd.f32 0.0, %v512
        %v514 = vpop.f32.mrb[0].mxu0
        %515 = vdwg.mxu0
        %v517 = vsel %vm368, %v513, 0
        %519 = vmatprep.subr.mxu0 0.0
        %520 = vmatpush1.msra.mxu0 %v354
        %521 = vmatprep.subr.mxu0 0.0
        %522 = vmatpush1.msra.mxu0 %v355
        %523 = vmatprep.subr.mxu0 0.0
        %524 = vmatpush1.msra.mxu0 %v356
        %525 = vmatprep.subr.mxu0 0.0
        %526 = vmatpush1.msra.mxu0 %v357
        %527 = vmatprep.subr.mxu0 0.0
        %528 = vmatpush1.msra.mxu0 0.0
        %529 = vmatprep.subr.mxu0 0.0
        %530 = vmatpush1.msra.mxu0 0.0
        %531 = vmatprep.subr.mxu0 0.0
        %532 = vmatpush1.msra.mxu0 0.0
        %533 = vmatprep.subr.mxu0 0.0
        %534 = vmatpush1.msra.mxu0 0.0
        %535 = vmatprep.subr.mxu0 0.0
        %536 = vmatpush1.msra.mxu0 0.0
        %537 = vmatprep.subr.mxu0 0.0
        %538 = vmatpush1.msra.mxu0 0.0
        %539 = vmatprep.subr.mxu0 0.0
        %540 = vmatpush1.msra.mxu0 0.0
        %541 = vmatprep.subr.mxu0 0.0
        %542 = vmatpush1.msra.mxu0 0.0
        %543 = vmatprep.subr.mxu0 0.0
        %544 = vmatpush1.msra.mxu0 0.0
        %545 = vmatprep.subr.mxu0 0.0
        %546 = vmatpush1.msra.mxu0 0.0
        %547 = vmatprep.subr.mxu0 0.0
        %548 = vmatpush1.msra.mxu0 0.0
        %549 = vmatprep.subr.mxu0 0.0
        %550 = vmatpush1.msra.mxu0 0.0
        %551 = vmatprep.subr.mxu0 0.0
        %552 = vmatpush1.msra.mxu0 0.0
        %553 = vmatprep.subr.mxu0 0.0
        %554 = vmatpush1.msra.mxu0 0.0
        %555 = vmatprep.subr.mxu0 0.0
        %556 = vmatpush1.msra.mxu0 0.0
        %557 = vmatprep.subr.mxu0 0.0
        %558 = vmatpush1.msra.mxu0 0.0
        %559 = vmatprep.subr.mxu0 0.0
        %560 = vmatpush1.msra.mxu0 0.0
        %561 = vmatprep.subr.mxu0 0.0
        %562 = vmatpush1.msra.mxu0 0.0
        %563 = vmatprep.subr.mxu0 0.0
        %564 = vmatpush1.msra.mxu0 0.0
        %565 = vmatprep.subr.mxu0 0.0
        %566 = vmatpush1.msra.mxu0 0.0
        %567 = vmatprep.subr.mxu0 0.0
        %568 = vmatpush1.msra.mxu0 0.0
        %569 = vmatprep.subr.mxu0 0.0
        %570 = vmatpush1.msra.mxu0 0.0
        %571 = vmatprep.subr.mxu0 0.0
        %572 = vmatpush1.msra.mxu0 0.0
        %573 = vmatprep.subr.mxu0 0.0
        %574 = vmatpush1.msra.mxu0 0.0
        %575 = vmatprep.subr.mxu0 0.0
        %576 = vmatpush1.msra.mxu0 0.0
        %577 = vmatprep.subr.mxu0 0.0
        %578 = vmatpush1.msra.mxu0 0.0
        %579 = vmatprep.subr.mxu0 0.0
        %580 = vmatpush1.msra.mxu0 0.0
        %581 = vmatprep.subr.mxu0 0.0
        %582 = vmatpush1.msra.mxu0 0.0
        %583 = vmatprep.mubr.f32.mxu0 0.0
        %584 = vmatmul.mubr.f32.gmra.mrb[0].mxu0 %v517
        %v585 = vpop.f32.mrb[0].mxu0
        %v586 = vadd.f32 0.0, %v585
        %v587 = vpop.f32.mrb[0].mxu0
        %588 = vdwg.mxu0
        %v589 = vadd.f32 %v439, %v586
        %v590 = vxor.u32 %v589, 2147483648
        %v591 = vmul.f32 %v590, 1.442695
        %v592 = vpow.pop %v591
        %v593 = vadd.f32 %v592, 1.0
        %v594 = vrcp.pop %v593
        %v595 = vmul.f32 1.0, %v594
        %v596 = vmul.f32 %v513, %v595
        %v598 = vsel %vm368, %v596, 0
        %600 = vmatprep.subr.mxu0 0.0
        %601 = vmatpush1.msra.mxu0 %v358
        %602 = vmatprep.subr.mxu0 0.0
        %603 = vmatpush1.msra.mxu0 %v359
        %604 = vmatprep.subr.mxu0 0.0
        %605 = vmatpush1.msra.mxu0 %v360
        %606 = vmatprep.subr.mxu0 0.0
        %607 = vmatpush1.msra.mxu0 %v361
        %608 = vmatprep.subr.mxu0 0.0
        %609 = vmatpush1.msra.mxu0 0.0
        %610 = vmatprep.subr.mxu0 0.0
        %611 = vmatpush1.msra.mxu0 0.0
        %612 = vmatprep.subr.mxu0 0.0
        %613 = vmatpush1.msra.mxu0 0.0
        %614 = vmatprep.subr.mxu0 0.0
        %615 = vmatpush1.msra.mxu0 0.0
        %616 = vmatprep.subr.mxu0 0.0
        %617 = vmatpush1.msra.mxu0 0.0
        %618 = vmatprep.subr.mxu0 0.0
        %619 = vmatpush1.msra.mxu0 0.0
        %620 = vmatprep.subr.mxu0 0.0
        %621 = vmatpush1.msra.mxu0 0.0
        %622 = vmatprep.subr.mxu0 0.0
        %623 = vmatpush1.msra.mxu0 0.0
        %624 = vmatprep.subr.mxu0 0.0
        %625 = vmatpush1.msra.mxu0 0.0
        %626 = vmatprep.subr.mxu0 0.0
        %627 = vmatpush1.msra.mxu0 0.0
        %628 = vmatprep.subr.mxu0 0.0
        %629 = vmatpush1.msra.mxu0 0.0
        %630 = vmatprep.subr.mxu0 0.0
        %631 = vmatpush1.msra.mxu0 0.0
        %632 = vmatprep.subr.mxu0 0.0
        %633 = vmatpush1.msra.mxu0 0.0
        %634 = vmatprep.subr.mxu0 0.0
        %635 = vmatpush1.msra.mxu0 0.0
        %636 = vmatprep.subr.mxu0 0.0
        %637 = vmatpush1.msra.mxu0 0.0
        %638 = vmatprep.subr.mxu0 0.0
        %639 = vmatpush1.msra.mxu0 0.0
        %640 = vmatprep.subr.mxu0 0.0
        %641 = vmatpush1.msra.mxu0 0.0
        %642 = vmatprep.subr.mxu0 0.0
        %643 = vmatpush1.msra.mxu0 0.0
        %644 = vmatprep.subr.mxu0 0.0
        %645 = vmatpush1.msra.mxu0 0.0
        %646 = vmatprep.subr.mxu0 0.0
        %647 = vmatpush1.msra.mxu0 0.0
        %648 = vmatprep.subr.mxu0 0.0
        %649 = vmatpush1.msra.mxu0 0.0
        %650 = vmatprep.subr.mxu0 0.0
        %651 = vmatpush1.msra.mxu0 0.0
        %652 = vmatprep.subr.mxu0 0.0
        %653 = vmatpush1.msra.mxu0 0.0
        %654 = vmatprep.subr.mxu0 0.0
        %655 = vmatpush1.msra.mxu0 0.0
        %656 = vmatprep.subr.mxu0 0.0
        %657 = vmatpush1.msra.mxu0 0.0
        %658 = vmatprep.subr.mxu0 0.0
        %659 = vmatpush1.msra.mxu0 0.0
        %660 = vmatprep.subr.mxu0 0.0
        %661 = vmatpush1.msra.mxu0 0.0
        %662 = vmatprep.subr.mxu0 0.0
        %663 = vmatpush1.msra.mxu0 0.0
        %664 = vmatprep.mubr.f32.mxu0 0.0
        %665 = vmatmul.mubr.f32.gmra.mrb[0].mxu0 %v598
        %v666 = vpop.f32.mrb[0].mxu0
        %v667 = vadd.f32 0.0, %v666
        %v668 = vpop.f32.mrb[0].mxu0
        %669 = vdwg.mxu0
        %671 = vrot.lane.b32.xlu0 %v667, 64
        %v672 = vpop.permute.xlu0 %671
        %v674 = vadd.f32 %v439, %v672
        %v675 = vtanh.pop %v674
        %676 = vrot.lane.b32.xlu0 %v513, 32
        %v677 = vpop.permute.xlu0 %676
        %v679 = vmul.f32 %v595, %v677
        %v680 = vsub.f32 1.0, %v595
        %682 = vrot.lane.b32.xlu0 %v675, 96
        %v683 = vpop.permute.xlu0 %682
        %v685 = vmul.f32 %v680, %v683
        %v686 = vadd.f32 %v679, %v685
        %687 = vrot.lane.b32.xlu0 %v347, 32
        %v688 = vpop.permute.xlu0 %687
        %v690 = vsub.f32 %v686, %v688
        %691 = vset.pattern.permute.xlu0 0
        %692 = vperm.xlu0 %691, %v348
        %v693 = vpop.permute.xlu0 %692
        %v695 = vlaneseq
        %v696 = vshrl.u32 %v695, 7
        %v697 = vsub.s32 0, %v696
        %v698 = vrot.slane %v690, %v697
        %v699 = vmul.f32 %v693, %v698
        %701 = vrot.lane.b32.xlu0 %v699, 96
        %v702 = vpop.permute.xlu0 %701
        %v704 = vadd.f32 %v513, %v702
        %v706 = vrot.slane %v704, 1
        %v707 = vsel %vm368, %v706, 0
        %709 = vmatprep.subr.mxu0 0.0
        %710 = vmatpush1.msra.mxu0 %v354
        %711 = vmatprep.subr.mxu0 0.0
        %712 = vmatpush1.msra.mxu0 %v355
        %713 = vmatprep.subr.mxu0 0.0
        %714 = vmatpush1.msra.mxu0 %v356
        %715 = vmatprep.subr.mxu0 0.0
        %716 = vmatpush1.msra.mxu0 %v357
        %717 = vmatprep.subr.mxu0 0.0
        %718 = vmatpush1.msra.mxu0 0.0
        %719 = vmatprep.subr.mxu0 0.0
        %720 = vmatpush1.msra.mxu0 0.0
        %721 = vmatprep.subr.mxu0 0.0
        %722 = vmatpush1.msra.mxu0 0.0
        %723 = vmatprep.subr.mxu0 0.0
        %724 = vmatpush1.msra.mxu0 0.0
        %725 = vmatprep.subr.mxu0 0.0
        %726 = vmatpush1.msra.mxu0 0.0
        %727 = vmatprep.subr.mxu0 0.0
        %728 = vmatpush1.msra.mxu0 0.0
        %729 = vmatprep.subr.mxu0 0.0
        %730 = vmatpush1.msra.mxu0 0.0
        %731 = vmatprep.subr.mxu0 0.0
        %732 = vmatpush1.msra.mxu0 0.0
        %733 = vmatprep.subr.mxu0 0.0
        %734 = vmatpush1.msra.mxu0 0.0
        %735 = vmatprep.subr.mxu0 0.0
        %736 = vmatpush1.msra.mxu0 0.0
        %737 = vmatprep.subr.mxu0 0.0
        %738 = vmatpush1.msra.mxu0 0.0
        %739 = vmatprep.subr.mxu0 0.0
        %740 = vmatpush1.msra.mxu0 0.0
        %741 = vmatprep.subr.mxu0 0.0
        %742 = vmatpush1.msra.mxu0 0.0
        %743 = vmatprep.subr.mxu0 0.0
        %744 = vmatpush1.msra.mxu0 0.0
        %745 = vmatprep.subr.mxu0 0.0
        %746 = vmatpush1.msra.mxu0 0.0
        %747 = vmatprep.subr.mxu0 0.0
        %748 = vmatpush1.msra.mxu0 0.0
        %749 = vmatprep.subr.mxu0 0.0
        %750 = vmatpush1.msra.mxu0 0.0
        %751 = vmatprep.subr.mxu0 0.0
        %752 = vmatpush1.msra.mxu0 0.0
        %753 = vmatprep.subr.mxu0 0.0
        %754 = vmatpush1.msra.mxu0 0.0
        %755 = vmatprep.subr.mxu0 0.0
        %756 = vmatpush1.msra.mxu0 0.0
        %757 = vmatprep.subr.mxu0 0.0
        %758 = vmatpush1.msra.mxu0 0.0
        %759 = vmatprep.subr.mxu0 0.0
        %760 = vmatpush1.msra.mxu0 0.0
        %761 = vmatprep.subr.mxu0 0.0
        %762 = vmatpush1.msra.mxu0 0.0
        %763 = vmatprep.subr.mxu0 0.0
        %764 = vmatpush1.msra.mxu0 0.0
        %765 = vmatprep.subr.mxu0 0.0
        %766 = vmatpush1.msra.mxu0 0.0
        %767 = vmatprep.subr.mxu0 0.0
        %768 = vmatpush1.msra.mxu0 0.0
        %769 = vmatprep.subr.mxu0 0.0
        %770 = vmatpush1.msra.mxu0 0.0
        %771 = vmatprep.subr.mxu0 0.0
        %772 = vmatpush1.msra.mxu0 0.0
        %773 = vmatprep.mubr.f32.mxu0 0.0
        %774 = vmatmul.mubr.f32.gmra.mrb[0].mxu0 %v707
        %v775 = vpop.f32.mrb[0].mxu0
        %v776 = vadd.f32 0.0, %v775
        %v777 = vpop.f32.mrb[0].mxu0
        %778 = vdwg.mxu0
        %v780 = vrot.slane %v776, 7
        %v782 = vadd.f32 %v439, %v780
        %v783 = vxor.u32 %v782, 2147483648
        %v784 = vmul.f32 %v783, 1.442695
        %v785 = vpow.pop %v784
        %v786 = vadd.f32 %v785, 1.0
        %v787 = vrcp.pop %v786
        %v788 = vmul.f32 1.0, %v787
        %v789 = vmul.f32 %v704, %v788
        %v791 = vrot.slane %v789, 1
        %v792 = vsel %vm368, %v791, 0
        %794 = vmatprep.subr.mxu0 0.0
        %795 = vmatpush1.msra.mxu0 %v358
        %796 = vmatprep.subr.mxu0 0.0
        %797 = vmatpush1.msra.mxu0 %v359
        %798 = vmatprep.subr.mxu0 0.0
        %799 = vmatpush1.msra.mxu0 %v360
        %800 = vmatprep.subr.mxu0 0.0
        %801 = vmatpush1.msra.mxu0 %v361
        %802 = vmatprep.subr.mxu0 0.0
        %803 = vmatpush1.msra.mxu0 0.0
        %804 = vmatprep.subr.mxu0 0.0
        %805 = vmatpush1.msra.mxu0 0.0
        %806 = vmatprep.subr.mxu0 0.0
        %807 = vmatpush1.msra.mxu0 0.0
        %808 = vmatprep.subr.mxu0 0.0
        %809 = vmatpush1.msra.mxu0 0.0
        %810 = vmatprep.subr.mxu0 0.0
        %811 = vmatpush1.msra.mxu0 0.0
        %812 = vmatprep.subr.mxu0 0.0
        %813 = vmatpush1.msra.mxu0 0.0
        %814 = vmatprep.subr.mxu0 0.0
        %815 = vmatpush1.msra.mxu0 0.0
        %816 = vmatprep.subr.mxu0 0.0
        %817 = vmatpush1.msra.mxu0 0.0
        %818 = vmatprep.subr.mxu0 0.0
        %819 = vmatpush1.msra.mxu0 0.0
        %820 = vmatprep.subr.mxu0 0.0
        %821 = vmatpush1.msra.mxu0 0.0
        %822 = vmatprep.subr.mxu0 0.0
        %823 = vmatpush1.msra.mxu0 0.0
        %824 = vmatprep.subr.mxu0 0.0
        %825 = vmatpush1.msra.mxu0 0.0
        %826 = vmatprep.subr.mxu0 0.0
        %827 = vmatpush1.msra.mxu0 0.0
        %828 = vmatprep.subr.mxu0 0.0
        %829 = vmatpush1.msra.mxu0 0.0
        %830 = vmatprep.subr.mxu0 0.0
        %831 = vmatpush1.msra.mxu0 0.0
        %832 = vmatprep.subr.mxu0 0.0
        %833 = vmatpush1.msra.mxu0 0.0
        %834 = vmatprep.subr.mxu0 0.0
        %835 = vmatpush1.msra.mxu0 0.0
        %836 = vmatprep.subr.mxu0 0.0
        %837 = vmatpush1.msra.mxu0 0.0
        %838 = vmatprep.subr.mxu0 0.0
        %839 = vmatpush1.msra.mxu0 0.0
        %840 = vmatprep.subr.mxu0 0.0
        %841 = vmatpush1.msra.mxu0 0.0
        %842 = vmatprep.subr.mxu0 0.0
        %843 = vmatpush1.msra.mxu0 0.0
        %844 = vmatprep.subr.mxu0 0.0
        %845 = vmatpush1.msra.mxu0 0.0
        %846 = vmatprep.subr.mxu0 0.0
        %847 = vmatpush1.msra.mxu0 0.0
        %848 = vmatprep.subr.mxu0 0.0
        %849 = vmatpush1.msra.mxu0 0.0
        %850 = vmatprep.subr.mxu0 0.0
        %851 = vmatpush1.msra.mxu0 0.0
        %852 = vmatprep.subr.mxu0 0.0
        %853 = vmatpush1.msra.mxu0 0.0
        %854 = vmatprep.subr.mxu0 0.0
        %855 = vmatpush1.msra.mxu0 0.0
        %856 = vmatprep.subr.mxu0 0.0
        %857 = vmatpush1.msra.mxu0 0.0
        %858 = vmatprep.mubr.f32.mxu0 0.0
        %859 = vmatmul.mubr.f32.gmra.mrb[0].mxu0 %v792
        %v860 = vpop.f32.mrb[0].mxu0
        %v861 = vadd.f32 0.0, %v860
        %v862 = vpop.f32.mrb[0].mxu0
        %863 = vdwg.mxu0
        %v865 = vrot.slane %v861, 7
        %866 = vrot.lane.b32.xlu0 %v865, 64
        %v867 = vpop.permute.xlu0 %866
        %v869 = vadd.f32 %v439, %v867
        %v870 = vtanh.pop %v869
        %871 = vrot.lane.b32.xlu0 %v704, 32
        %v872 = vpop.permute.xlu0 %871
        %v874 = vmul.f32 %v788, %v872
        %v875 = vsub.f32 1.0, %v788
        %877 = vrot.lane.b32.xlu0 %v870, 96
        %v878 = vpop.permute.xlu0 %877
        %v880 = vmul.f32 %v875, %v878
        %v881 = vadd.f32 %v874, %v880
        %v882 = vsub.f32 %v881, %v688
        %883 = vset.pattern.permute.xlu0 1
        %884 = vperm.xlu0 %883, %v348
        %v885 = vpop.permute.xlu0 %884
        %v887 = vlaneseq
        %v888 = vshrl.u32 %v887, 7
        %v889 = vsub.s32 1, %v888
        %v890 = vrot.slane %v882, %v889
        %v891 = vmul.f32 %v885, %v890
        %893 = vrot.lane.b32.xlu0 %v891, 96
        %v894 = vpop.permute.xlu0 %893
        %v896 = vadd.f32 %v704, %v894
        %v898 = vrot.slane %v896, 2
        %v899 = vsel %vm368, %v898, 0
        %901 = vmatprep.subr.mxu0 0.0
        %902 = vmatpush1.msra.mxu0 %v354
        %903 = vmatprep.subr.mxu0 0.0
        %904 = vmatpush1.msra.mxu0 %v355
        %905 = vmatprep.subr.mxu0 0.0
        %906 = vmatpush1.msra.mxu0 %v356
        %907 = vmatprep.subr.mxu0 0.0
        %908 = vmatpush1.msra.mxu0 %v357
        %909 = vmatprep.subr.mxu0 0.0
        %910 = vmatpush1.msra.mxu0 0.0
        %911 = vmatprep.subr.mxu0 0.0
        %912 = vmatpush1.msra.mxu0 0.0
        %913 = vmatprep.subr.mxu0 0.0
        %914 = vmatpush1.msra.mxu0 0.0
        %915 = vmatprep.subr.mxu0 0.0
        %916 = vmatpush1.msra.mxu0 0.0
        %917 = vmatprep.subr.mxu0 0.0
        %918 = vmatpush1.msra.mxu0 0.0
        %919 = vmatprep.subr.mxu0 0.0
        %920 = vmatpush1.msra.mxu0 0.0
        %921 = vmatprep.subr.mxu0 0.0
        %922 = vmatpush1.msra.mxu0 0.0
        %923 = vmatprep.subr.mxu0 0.0
        %924 = vmatpush1.msra.mxu0 0.0
        %925 = vmatprep.subr.mxu0 0.0
        %926 = vmatpush1.msra.mxu0 0.0
        %927 = vmatprep.subr.mxu0 0.0
        %928 = vmatpush1.msra.mxu0 0.0
        %929 = vmatprep.subr.mxu0 0.0
        %930 = vmatpush1.msra.mxu0 0.0
        %931 = vmatprep.subr.mxu0 0.0
        %932 = vmatpush1.msra.mxu0 0.0
        %933 = vmatprep.subr.mxu0 0.0
        %934 = vmatpush1.msra.mxu0 0.0
        %935 = vmatprep.subr.mxu0 0.0
        %936 = vmatpush1.msra.mxu0 0.0
        %937 = vmatprep.subr.mxu0 0.0
        %938 = vmatpush1.msra.mxu0 0.0
        %939 = vmatprep.subr.mxu0 0.0
        %940 = vmatpush1.msra.mxu0 0.0
        %941 = vmatprep.subr.mxu0 0.0
        %942 = vmatpush1.msra.mxu0 0.0
        %943 = vmatprep.subr.mxu0 0.0
        %944 = vmatpush1.msra.mxu0 0.0
        %945 = vmatprep.subr.mxu0 0.0
        %946 = vmatpush1.msra.mxu0 0.0
        %947 = vmatprep.subr.mxu0 0.0
        %948 = vmatpush1.msra.mxu0 0.0
        %949 = vmatprep.subr.mxu0 0.0
        %950 = vmatpush1.msra.mxu0 0.0
        %951 = vmatprep.subr.mxu0 0.0
        %952 = vmatpush1.msra.mxu0 0.0
        %953 = vmatprep.subr.mxu0 0.0
        %954 = vmatpush1.msra.mxu0 0.0
        %955 = vmatprep.subr.mxu0 0.0
        %956 = vmatpush1.msra.mxu0 0.0
        %957 = vmatprep.subr.mxu0 0.0
        %958 = vmatpush1.msra.mxu0 0.0
        %959 = vmatprep.subr.mxu0 0.0
        %960 = vmatpush1.msra.mxu0 0.0
        %961 = vmatprep.subr.mxu0 0.0
        %962 = vmatpush1.msra.mxu0 0.0
        %963 = vmatprep.subr.mxu0 0.0
        %964 = vmatpush1.msra.mxu0 0.0
        %965 = vmatprep.mubr.f32.mxu0 0.0
        %966 = vmatmul.mubr.f32.gmra.mrb[0].mxu0 %v899
        %v967 = vpop.f32.mrb[0].mxu0
        %v968 = vadd.f32 0.0, %v967
        %v969 = vpop.f32.mrb[0].mxu0
        %970 = vdwg.mxu0
        %v972 = vrot.slane %v968, 6
        %v974 = vadd.f32 %v439, %v972
        %v975 = vxor.u32 %v974, 2147483648
        %v976 = vmul.f32 %v975, 1.442695
        %v977 = vpow.pop %v976
        %v978 = vadd.f32 %v977, 1.0
        %v979 = vrcp.pop %v978
        %v980 = vmul.f32 1.0, %v979
        %v981 = vmul.f32 %v896, %v980
        %v983 = vrot.slane %v981, 2
        %v984 = vsel %vm368, %v983, 0
        %986 = vmatprep.subr.mxu0 0.0
        %987 = vmatpush1.msra.mxu0 %v358
        %988 = vmatprep.subr.mxu0 0.0
        %989 = vmatpush1.msra.mxu0 %v359
        %990 = vmatprep.subr.mxu0 0.0
        %991 = vmatpush1.msra.mxu0 %v360
        %992 = vmatprep.subr.mxu0 0.0
        %993 = vmatpush1.msra.mxu0 %v361
        %994 = vmatprep.subr.mxu0 0.0
        %995 = vmatpush1.msra.mxu0 0.0
        %996 = vmatprep.subr.mxu0 0.0
        %997 = vmatpush1.msra.mxu0 0.0
        %998 = vmatprep.subr.mxu0 0.0
        %999 = vmatpush1.msra.mxu0 0.0
        %1000 = vmatprep.subr.mxu0 0.0
        %1001 = vmatpush1.msra.mxu0 0.0
        %1002 = vmatprep.subr.mxu0 0.0
        %1003 = vmatpush1.msra.mxu0 0.0
        %1004 = vmatprep.subr.mxu0 0.0
        %1005 = vmatpush1.msra.mxu0 0.0
        %1006 = vmatprep.subr.mxu0 0.0
        %1007 = vmatpush1.msra.mxu0 0.0
        %1008 = vmatprep.subr.mxu0 0.0
        %1009 = vmatpush1.msra.mxu0 0.0
        %1010 = vmatprep.subr.mxu0 0.0
        %1011 = vmatpush1.msra.mxu0 0.0
        %1012 = vmatprep.subr.mxu0 0.0
        %1013 = vmatpush1.msra.mxu0 0.0
        %1014 = vmatprep.subr.mxu0 0.0
        %1015 = vmatpush1.msra.mxu0 0.0
        %1016 = vmatprep.subr.mxu0 0.0
        %1017 = vmatpush1.msra.mxu0 0.0
        %1018 = vmatprep.subr.mxu0 0.0
        %1019 = vmatpush1.msra.mxu0 0.0
        %1020 = vmatprep.subr.mxu0 0.0
        %1021 = vmatpush1.msra.mxu0 0.0
        %1022 = vmatprep.subr.mxu0 0.0
        %1023 = vmatpush1.msra.mxu0 0.0
        %1024 = vmatprep.subr.mxu0 0.0
        %1025 = vmatpush1.msra.mxu0 0.0
        %1026 = vmatprep.subr.mxu0 0.0
        %1027 = vmatpush1.msra.mxu0 0.0
        %1028 = vmatprep.subr.mxu0 0.0
        %1029 = vmatpush1.msra.mxu0 0.0
        %1030 = vmatprep.subr.mxu0 0.0
        %1031 = vmatpush1.msra.mxu0 0.0
        %1032 = vmatprep.subr.mxu0 0.0
        %1033 = vmatpush1.msra.mxu0 0.0
        %1034 = vmatprep.subr.mxu0 0.0
        %1035 = vmatpush1.msra.mxu0 0.0
        %1036 = vmatprep.subr.mxu0 0.0
        %1037 = vmatpush1.msra.mxu0 0.0
        %1038 = vmatprep.subr.mxu0 0.0
        %1039 = vmatpush1.msra.mxu0 0.0
        %1040 = vmatprep.subr.mxu0 0.0
        %1041 = vmatpush1.msra.mxu0 0.0
        %1042 = vmatprep.subr.mxu0 0.0
        %1043 = vmatpush1.msra.mxu0 0.0
        %1044 = vmatprep.subr.mxu0 0.0
        %1045 = vmatpush1.msra.mxu0 0.0
        %1046 = vmatprep.subr.mxu0 0.0
        %1047 = vmatpush1.msra.mxu0 0.0
        %1048 = vmatprep.subr.mxu0 0.0
        %1049 = vmatpush1.msra.mxu0 0.0
        %1050 = vmatprep.mubr.f32.mxu0 0.0
        %1051 = vmatmul.mubr.f32.gmra.mrb[0].mxu0 %v984
        %v1052 = vpop.f32.mrb[0].mxu0
        %v1053 = vadd.f32 0.0, %v1052
        %v1054 = vpop.f32.mrb[0].mxu0
        %1055 = vdwg.mxu0
        %v1057 = vrot.slane %v1053, 6
        %1058 = vrot.lane.b32.xlu0 %v1057, 64
        %v1059 = vpop.permute.xlu0 %1058
        %v1061 = vadd.f32 %v439, %v1059
        %v1062 = vtanh.pop %v1061
        %1063 = vrot.lane.b32.xlu0 %v896, 32
        %v1064 = vpop.permute.xlu0 %1063
        %v1066 = vmul.f32 %v980, %v1064
        %v1067 = vsub.f32 1.0, %v980
        %1069 = vrot.lane.b32.xlu0 %v1062, 96
        %v1070 = vpop.permute.xlu0 %1069
        %v1072 = vmul.f32 %v1067, %v1070
        %v1073 = vadd.f32 %v1066, %v1072
        %v1074 = vsub.f32 %v1073, %v688
        %1075 = vset.pattern.permute.xlu0 2
        %1076 = vperm.xlu0 %1075, %v348
        %v1077 = vpop.permute.xlu0 %1076
        %v1079 = vlaneseq
        %v1080 = vshrl.u32 %v1079, 7
        %v1081 = vsub.s32 2, %v1080
        %v1082 = vrot.slane %v1074, %v1081
        %v1083 = vmul.f32 %v1077, %v1082
        %1085 = vrot.lane.b32.xlu0 %v1083, 96
        %v1086 = vpop.permute.xlu0 %1085
        %v1088 = vadd.f32 %v896, %v1086
        %v1090 = vrot.slane %v1088, 3
        %v1091 = vsel %vm368, %v1090, 0
        %1093 = vmatprep.subr.mxu0 0.0
        %1094 = vmatpush1.msra.mxu0 %v354
        %1095 = vmatprep.subr.mxu0 0.0
        %1096 = vmatpush1.msra.mxu0 %v355
        %1097 = vmatprep.subr.mxu0 0.0
        %1098 = vmatpush1.msra.mxu0 %v356
        %1099 = vmatprep.subr.mxu0 0.0
        %1100 = vmatpush1.msra.mxu0 %v357
        %1101 = vmatprep.subr.mxu0 0.0
        %1102 = vmatpush1.msra.mxu0 0.0
        %1103 = vmatprep.subr.mxu0 0.0
        %1104 = vmatpush1.msra.mxu0 0.0
        %1105 = vmatprep.subr.mxu0 0.0
        %1106 = vmatpush1.msra.mxu0 0.0
        %1107 = vmatprep.subr.mxu0 0.0
        %1108 = vmatpush1.msra.mxu0 0.0
        %1109 = vmatprep.subr.mxu0 0.0
        %1110 = vmatpush1.msra.mxu0 0.0
        %1111 = vmatprep.subr.mxu0 0.0
        %1112 = vmatpush1.msra.mxu0 0.0
        %1113 = vmatprep.subr.mxu0 0.0
        %1114 = vmatpush1.msra.mxu0 0.0
        %1115 = vmatprep.subr.mxu0 0.0
        %1116 = vmatpush1.msra.mxu0 0.0
        %1117 = vmatprep.subr.mxu0 0.0
        %1118 = vmatpush1.msra.mxu0 0.0
        %1119 = vmatprep.subr.mxu0 0.0
        %1120 = vmatpush1.msra.mxu0 0.0
        %1121 = vmatprep.subr.mxu0 0.0
        %1122 = vmatpush1.msra.mxu0 0.0
        %1123 = vmatprep.subr.mxu0 0.0
        %1124 = vmatpush1.msra.mxu0 0.0
        %1125 = vmatprep.subr.mxu0 0.0
        %1126 = vmatpush1.msra.mxu0 0.0
        %1127 = vmatprep.subr.mxu0 0.0
        %1128 = vmatpush1.msra.mxu0 0.0
        %1129 = vmatprep.subr.mxu0 0.0
        %1130 = vmatpush1.msra.mxu0 0.0
        %1131 = vmatprep.subr.mxu0 0.0
        %1132 = vmatpush1.msra.mxu0 0.0
        %1133 = vmatprep.subr.mxu0 0.0
        %1134 = vmatpush1.msra.mxu0 0.0
        %1135 = vmatprep.subr.mxu0 0.0
        %1136 = vmatpush1.msra.mxu0 0.0
        %1137 = vmatprep.subr.mxu0 0.0
        %1138 = vmatpush1.msra.mxu0 0.0
        %1139 = vmatprep.subr.mxu0 0.0
        %1140 = vmatpush1.msra.mxu0 0.0
        %1141 = vmatprep.subr.mxu0 0.0
        %1142 = vmatpush1.msra.mxu0 0.0
        %1143 = vmatprep.subr.mxu0 0.0
        %1144 = vmatpush1.msra.mxu0 0.0
        %1145 = vmatprep.subr.mxu0 0.0
        %1146 = vmatpush1.msra.mxu0 0.0
        %1147 = vmatprep.subr.mxu0 0.0
        %1148 = vmatpush1.msra.mxu0 0.0
        %1149 = vmatprep.subr.mxu0 0.0
        %1150 = vmatpush1.msra.mxu0 0.0
        %1151 = vmatprep.subr.mxu0 0.0
        %1152 = vmatpush1.msra.mxu0 0.0
        %1153 = vmatprep.subr.mxu0 0.0
        %1154 = vmatpush1.msra.mxu0 0.0
        %1155 = vmatprep.subr.mxu0 0.0
        %1156 = vmatpush1.msra.mxu0 0.0
        %1157 = vmatprep.mubr.f32.mxu0 0.0
        %1158 = vmatmul.mubr.f32.gmra.mrb[0].mxu0 %v1091
        %v1159 = vpop.f32.mrb[0].mxu0
        %v1160 = vadd.f32 0.0, %v1159
        %v1161 = vpop.f32.mrb[0].mxu0
        %1162 = vdwg.mxu0
        %v1164 = vrot.slane %v1160, 5
        %v1166 = vadd.f32 %v439, %v1164
        %v1167 = vxor.u32 %v1166, 2147483648
        %v1168 = vmul.f32 %v1167, 1.442695
        %v1169 = vpow.pop %v1168
        %v1170 = vadd.f32 %v1169, 1.0
        %v1171 = vrcp.pop %v1170
        %v1172 = vmul.f32 1.0, %v1171
        %v1173 = vmul.f32 %v1088, %v1172
        %v1175 = vrot.slane %v1173, 3
        %v1176 = vsel %vm368, %v1175, 0
        %1178 = vmatprep.subr.mxu0 0.0
        %1179 = vmatpush1.msra.mxu0 %v358
        %1180 = vmatprep.subr.mxu0 0.0
        %1181 = vmatpush1.msra.mxu0 %v359
        %1182 = vmatprep.subr.mxu0 0.0
        %1183 = vmatpush1.msra.mxu0 %v360
        %1184 = vmatprep.subr.mxu0 0.0
        %1185 = vmatpush1.msra.mxu0 %v361
        %1186 = vmatprep.subr.mxu0 0.0
        %1187 = vmatpush1.msra.mxu0 0.0
        %1188 = vmatprep.subr.mxu0 0.0
        %1189 = vmatpush1.msra.mxu0 0.0
        %1190 = vmatprep.subr.mxu0 0.0
        %1191 = vmatpush1.msra.mxu0 0.0
        %1192 = vmatprep.subr.mxu0 0.0
        %1193 = vmatpush1.msra.mxu0 0.0
        %1194 = vmatprep.subr.mxu0 0.0
        %1195 = vmatpush1.msra.mxu0 0.0
        %1196 = vmatprep.subr.mxu0 0.0
        %1197 = vmatpush1.msra.mxu0 0.0
        %1198 = vmatprep.subr.mxu0 0.0
        %1199 = vmatpush1.msra.mxu0 0.0
        %1200 = vmatprep.subr.mxu0 0.0
        %1201 = vmatpush1.msra.mxu0 0.0
        %1202 = vmatprep.subr.mxu0 0.0
        %1203 = vmatpush1.msra.mxu0 0.0
        %1204 = vmatprep.subr.mxu0 0.0
        %1205 = vmatpush1.msra.mxu0 0.0
        %1206 = vmatprep.subr.mxu0 0.0
        %1207 = vmatpush1.msra.mxu0 0.0
        %1208 = vmatprep.subr.mxu0 0.0
        %1209 = vmatpush1.msra.mxu0 0.0
        %1210 = vmatprep.subr.mxu0 0.0
        %1211 = vmatpush1.msra.mxu0 0.0
        %1212 = vmatprep.subr.mxu0 0.0
        %1213 = vmatpush1.msra.mxu0 0.0
        %1214 = vmatprep.subr.mxu0 0.0
        %1215 = vmatpush1.msra.mxu0 0.0
        %1216 = vmatprep.subr.mxu0 0.0
        %1217 = vmatpush1.msra.mxu0 0.0
        %1218 = vmatprep.subr.mxu0 0.0
        %1219 = vmatpush1.msra.mxu0 0.0
        %1220 = vmatprep.subr.mxu0 0.0
        %1221 = vmatpush1.msra.mxu0 0.0
        %1222 = vmatprep.subr.mxu0 0.0
        %1223 = vmatpush1.msra.mxu0 0.0
        %1224 = vmatprep.subr.mxu0 0.0
        %1225 = vmatpush1.msra.mxu0 0.0
        %1226 = vmatprep.subr.mxu0 0.0
        %1227 = vmatpush1.msra.mxu0 0.0
        %1228 = vmatprep.subr.mxu0 0.0
        %1229 = vmatpush1.msra.mxu0 0.0
        %1230 = vmatprep.subr.mxu0 0.0
        %1231 = vmatpush1.msra.mxu0 0.0
        %1232 = vmatprep.subr.mxu0 0.0
        %1233 = vmatpush1.msra.mxu0 0.0
        %1234 = vmatprep.subr.mxu0 0.0
        %1235 = vmatpush1.msra.mxu0 0.0
        %1236 = vmatprep.subr.mxu0 0.0
        %1237 = vmatpush1.msra.mxu0 0.0
        %1238 = vmatprep.subr.mxu0 0.0
        %1239 = vmatpush1.msra.mxu0 0.0
        %1240 = vmatprep.subr.mxu0 0.0
        %1241 = vmatpush1.msra.mxu0 0.0
        %1242 = vmatprep.mubr.f32.mxu0 0.0
        %1243 = vmatmul.mubr.f32.gmra.mrb[0].mxu0 %v1176
        %v1244 = vpop.f32.mrb[0].mxu0
        %v1245 = vadd.f32 0.0, %v1244
        %v1246 = vpop.f32.mrb[0].mxu0
        %1247 = vdwg.mxu0
        %v1249 = vrot.slane %v1245, 5
        %1250 = vrot.lane.b32.xlu0 %v1249, 64
        %v1251 = vpop.permute.xlu0 %1250
        %v1253 = vadd.f32 %v439, %v1251
        %v1254 = vtanh.pop %v1253
        %1255 = vrot.lane.b32.xlu0 %v1088, 32
        %v1256 = vpop.permute.xlu0 %1255
        %v1258 = vmul.f32 %v1172, %v1256
        %v1259 = vsub.f32 1.0, %v1172
        %1261 = vrot.lane.b32.xlu0 %v1254, 96
        %v1262 = vpop.permute.xlu0 %1261
        %v1264 = vmul.f32 %v1259, %v1262
        %v1265 = vadd.f32 %v1258, %v1264
        %v1266 = vsub.f32 %v1265, %v688
        %1267 = vset.pattern.permute.xlu0 3
        %1268 = vperm.xlu0 %1267, %v348
        %v1269 = vpop.permute.xlu0 %1268
        %v1271 = vlaneseq
        %v1272 = vshrl.u32 %v1271, 7
        %v1273 = vsub.s32 3, %v1272
        %v1274 = vrot.slane %v1266, %v1273
        %v1275 = vmul.f32 %v1269, %v1274
        %1277 = vrot.lane.b32.xlu0 %v1275, 96
        %v1278 = vpop.permute.xlu0 %1277
        %v1280 = vadd.f32 %v1088, %v1278
        %v1282 = vrot.slane %v1280, 4
        %v1283 = vsel %vm368, %v1282, 0
        %1285 = vmatprep.subr.mxu0 0.0
        %1286 = vmatpush1.msra.mxu0 %v354
        %1287 = vmatprep.subr.mxu0 0.0
        %1288 = vmatpush1.msra.mxu0 %v355
        %1289 = vmatprep.subr.mxu0 0.0
        %1290 = vmatpush1.msra.mxu0 %v356
        %1291 = vmatprep.subr.mxu0 0.0
        %1292 = vmatpush1.msra.mxu0 %v357
        %1293 = vmatprep.subr.mxu0 0.0
        %1294 = vmatpush1.msra.mxu0 0.0
        %1295 = vmatprep.subr.mxu0 0.0
        %1296 = vmatpush1.msra.mxu0 0.0
        %1297 = vmatprep.subr.mxu0 0.0
        %1298 = vmatpush1.msra.mxu0 0.0
        %1299 = vmatprep.subr.mxu0 0.0
        %1300 = vmatpush1.msra.mxu0 0.0
        %1301 = vmatprep.subr.mxu0 0.0
        %1302 = vmatpush1.msra.mxu0 0.0
        %1303 = vmatprep.subr.mxu0 0.0
        %1304 = vmatpush1.msra.mxu0 0.0
        %1305 = vmatprep.subr.mxu0 0.0
        %1306 = vmatpush1.msra.mxu0 0.0
        %1307 = vmatprep.subr.mxu0 0.0
        %1308 = vmatpush1.msra.mxu0 0.0
        %1309 = vmatprep.subr.mxu0 0.0
        %1310 = vmatpush1.msra.mxu0 0.0
        %1311 = vmatprep.subr.mxu0 0.0
        %1312 = vmatpush1.msra.mxu0 0.0
        %1313 = vmatprep.subr.mxu0 0.0
        %1314 = vmatpush1.msra.mxu0 0.0
        %1315 = vmatprep.subr.mxu0 0.0
        %1316 = vmatpush1.msra.mxu0 0.0
        %1317 = vmatprep.subr.mxu0 0.0
        %1318 = vmatpush1.msra.mxu0 0.0
        %1319 = vmatprep.subr.mxu0 0.0
        %1320 = vmatpush1.msra.mxu0 0.0
        %1321 = vmatprep.subr.mxu0 0.0
        %1322 = vmatpush1.msra.mxu0 0.0
        %1323 = vmatprep.subr.mxu0 0.0
        %1324 = vmatpush1.msra.mxu0 0.0
        %1325 = vmatprep.subr.mxu0 0.0
        %1326 = vmatpush1.msra.mxu0 0.0
        %1327 = vmatprep.subr.mxu0 0.0
        %1328 = vmatpush1.msra.mxu0 0.0
        %1329 = vmatprep.subr.mxu0 0.0
        %1330 = vmatpush1.msra.mxu0 0.0
        %1331 = vmatprep.subr.mxu0 0.0
        %1332 = vmatpush1.msra.mxu0 0.0
        %1333 = vmatprep.subr.mxu0 0.0
        %1334 = vmatpush1.msra.mxu0 0.0
        %1335 = vmatprep.subr.mxu0 0.0
        %1336 = vmatpush1.msra.mxu0 0.0
        %1337 = vmatprep.subr.mxu0 0.0
        %1338 = vmatpush1.msra.mxu0 0.0
        %1339 = vmatprep.subr.mxu0 0.0
        %1340 = vmatpush1.msra.mxu0 0.0
        %1341 = vmatprep.subr.mxu0 0.0
        %1342 = vmatpush1.msra.mxu0 0.0
        %1343 = vmatprep.subr.mxu0 0.0
        %1344 = vmatpush1.msra.mxu0 0.0
        %1345 = vmatprep.subr.mxu0 0.0
        %1346 = vmatpush1.msra.mxu0 0.0
        %1347 = vmatprep.subr.mxu0 0.0
        %1348 = vmatpush1.msra.mxu0 0.0
        %1349 = vmatprep.mubr.f32.mxu0 0.0
        %1350 = vmatmul.mubr.f32.gmra.mrb[0].mxu0 %v1283
        %v1351 = vpop.f32.mrb[0].mxu0
        %v1352 = vadd.f32 0.0, %v1351
        %v1353 = vpop.f32.mrb[0].mxu0
        %1354 = vdwg.mxu0
        %v1356 = vrot.slane %v1352, 4
        %v1358 = vadd.f32 %v439, %v1356
        %v1359 = vxor.u32 %v1358, 2147483648
        %v1360 = vmul.f32 %v1359, 1.442695
        %v1361 = vpow.pop %v1360
        %v1362 = vadd.f32 %v1361, 1.0
        %v1363 = vrcp.pop %v1362
        %v1364 = vmul.f32 1.0, %v1363
        %v1365 = vmul.f32 %v1280, %v1364
        %v1367 = vrot.slane %v1365, 4
        %v1368 = vsel %vm368, %v1367, 0
        %1370 = vmatprep.subr.mxu0 0.0
        %1371 = vmatpush1.msra.mxu0 %v358
        %1372 = vmatprep.subr.mxu0 0.0
        %1373 = vmatpush1.msra.mxu0 %v359
        %1374 = vmatprep.subr.mxu0 0.0
        %1375 = vmatpush1.msra.mxu0 %v360
        %1376 = vmatprep.subr.mxu0 0.0
        %1377 = vmatpush1.msra.mxu0 %v361
        %1378 = vmatprep.subr.mxu0 0.0
        %1379 = vmatpush1.msra.mxu0 0.0
        %1380 = vmatprep.subr.mxu0 0.0
        %1381 = vmatpush1.msra.mxu0 0.0
        %1382 = vmatprep.subr.mxu0 0.0
        %1383 = vmatpush1.msra.mxu0 0.0
        %1384 = vmatprep.subr.mxu0 0.0
        %1385 = vmatpush1.msra.mxu0 0.0
        %1386 = vmatprep.subr.mxu0 0.0
        %1387 = vmatpush1.msra.mxu0 0.0
        %1388 = vmatprep.subr.mxu0 0.0
        %1389 = vmatpush1.msra.mxu0 0.0
        %1390 = vmatprep.subr.mxu0 0.0
        %1391 = vmatpush1.msra.mxu0 0.0
        %1392 = vmatprep.subr.mxu0 0.0
        %1393 = vmatpush1.msra.mxu0 0.0
        %1394 = vmatprep.subr.mxu0 0.0
        %1395 = vmatpush1.msra.mxu0 0.0
        %1396 = vmatprep.subr.mxu0 0.0
        %1397 = vmatpush1.msra.mxu0 0.0
        %1398 = vmatprep.subr.mxu0 0.0
        %1399 = vmatpush1.msra.mxu0 0.0
        %1400 = vmatprep.subr.mxu0 0.0
        %1401 = vmatpush1.msra.mxu0 0.0
        %1402 = vmatprep.subr.mxu0 0.0
        %1403 = vmatpush1.msra.mxu0 0.0
        %1404 = vmatprep.subr.mxu0 0.0
        %1405 = vmatpush1.msra.mxu0 0.0
        %1406 = vmatprep.subr.mxu0 0.0
        %1407 = vmatpush1.msra.mxu0 0.0
        %1408 = vmatprep.subr.mxu0 0.0
        %1409 = vmatpush1.msra.mxu0 0.0
        %1410 = vmatprep.subr.mxu0 0.0
        %1411 = vmatpush1.msra.mxu0 0.0
        %1412 = vmatprep.subr.mxu0 0.0
        %1413 = vmatpush1.msra.mxu0 0.0
        %1414 = vmatprep.subr.mxu0 0.0
        %1415 = vmatpush1.msra.mxu0 0.0
        %1416 = vmatprep.subr.mxu0 0.0
        %1417 = vmatpush1.msra.mxu0 0.0
        %1418 = vmatprep.subr.mxu0 0.0
        %1419 = vmatpush1.msra.mxu0 0.0
        %1420 = vmatprep.subr.mxu0 0.0
        %1421 = vmatpush1.msra.mxu0 0.0
        %1422 = vmatprep.subr.mxu0 0.0
        %1423 = vmatpush1.msra.mxu0 0.0
        %1424 = vmatprep.subr.mxu0 0.0
        %1425 = vmatpush1.msra.mxu0 0.0
        %1426 = vmatprep.subr.mxu0 0.0
        %1427 = vmatpush1.msra.mxu0 0.0
        %1428 = vmatprep.subr.mxu0 0.0
        %1429 = vmatpush1.msra.mxu0 0.0
        %1430 = vmatprep.subr.mxu0 0.0
        %1431 = vmatpush1.msra.mxu0 0.0
        %1432 = vmatprep.subr.mxu0 0.0
        %1433 = vmatpush1.msra.mxu0 0.0
        %1434 = vmatprep.mubr.f32.mxu0 0.0
        %1435 = vmatmul.mubr.f32.gmra.mrb[0].mxu0 %v1368
        %v1436 = vpop.f32.mrb[0].mxu0
        %v1437 = vadd.f32 0.0, %v1436
        %v1438 = vpop.f32.mrb[0].mxu0
        %1439 = vdwg.mxu0
        %v1441 = vrot.slane %v1437, 4
        %1442 = vrot.lane.b32.xlu0 %v1441, 64
        %v1443 = vpop.permute.xlu0 %1442
        %v1445 = vadd.f32 %v439, %v1443
        %v1446 = vtanh.pop %v1445
        %1447 = vrot.lane.b32.xlu0 %v1280, 32
        %v1448 = vpop.permute.xlu0 %1447
        %v1450 = vmul.f32 %v1364, %v1448
        %v1451 = vsub.f32 1.0, %v1364
        %1453 = vrot.lane.b32.xlu0 %v1446, 96
        %v1454 = vpop.permute.xlu0 %1453
        %v1456 = vmul.f32 %v1451, %v1454
        %v1457 = vadd.f32 %v1450, %v1456
        %v1458 = vsub.f32 %v1457, %v688
        %1459 = vset.pattern.permute.xlu0 4
        %1460 = vperm.xlu0 %1459, %v348
        %v1461 = vpop.permute.xlu0 %1460
        %v1463 = vlaneseq
        %v1464 = vshrl.u32 %v1463, 7
        %v1465 = vsub.s32 4, %v1464
        %v1466 = vrot.slane %v1458, %v1465
        %v1467 = vmul.f32 %v1461, %v1466
        %1469 = vrot.lane.b32.xlu0 %v1467, 96
        %v1470 = vpop.permute.xlu0 %1469
        %v1472 = vadd.f32 %v1280, %v1470
        %v1474 = vrot.slane %v1472, 5
        %v1475 = vsel %vm368, %v1474, 0
        %1477 = vmatprep.subr.mxu0 0.0
        %1478 = vmatpush1.msra.mxu0 %v354
        %1479 = vmatprep.subr.mxu0 0.0
        %1480 = vmatpush1.msra.mxu0 %v355
        %1481 = vmatprep.subr.mxu0 0.0
        %1482 = vmatpush1.msra.mxu0 %v356
        %1483 = vmatprep.subr.mxu0 0.0
        %1484 = vmatpush1.msra.mxu0 %v357
        %1485 = vmatprep.subr.mxu0 0.0
        %1486 = vmatpush1.msra.mxu0 0.0
        %1487 = vmatprep.subr.mxu0 0.0
        %1488 = vmatpush1.msra.mxu0 0.0
        %1489 = vmatprep.subr.mxu0 0.0
        %1490 = vmatpush1.msra.mxu0 0.0
        %1491 = vmatprep.subr.mxu0 0.0
        %1492 = vmatpush1.msra.mxu0 0.0
        %1493 = vmatprep.subr.mxu0 0.0
        %1494 = vmatpush1.msra.mxu0 0.0
        %1495 = vmatprep.subr.mxu0 0.0
        %1496 = vmatpush1.msra.mxu0 0.0
        %1497 = vmatprep.subr.mxu0 0.0
        %1498 = vmatpush1.msra.mxu0 0.0
        %1499 = vmatprep.subr.mxu0 0.0
        %1500 = vmatpush1.msra.mxu0 0.0
        %1501 = vmatprep.subr.mxu0 0.0
        %1502 = vmatpush1.msra.mxu0 0.0
        %1503 = vmatprep.subr.mxu0 0.0
        %1504 = vmatpush1.msra.mxu0 0.0
        %1505 = vmatprep.subr.mxu0 0.0
        %1506 = vmatpush1.msra.mxu0 0.0
        %1507 = vmatprep.subr.mxu0 0.0
        %1508 = vmatpush1.msra.mxu0 0.0
        %1509 = vmatprep.subr.mxu0 0.0
        %1510 = vmatpush1.msra.mxu0 0.0
        %1511 = vmatprep.subr.mxu0 0.0
        %1512 = vmatpush1.msra.mxu0 0.0
        %1513 = vmatprep.subr.mxu0 0.0
        %1514 = vmatpush1.msra.mxu0 0.0
        %1515 = vmatprep.subr.mxu0 0.0
        %1516 = vmatpush1.msra.mxu0 0.0
        %1517 = vmatprep.subr.mxu0 0.0
        %1518 = vmatpush1.msra.mxu0 0.0
        %1519 = vmatprep.subr.mxu0 0.0
        %1520 = vmatpush1.msra.mxu0 0.0
        %1521 = vmatprep.subr.mxu0 0.0
        %1522 = vmatpush1.msra.mxu0 0.0
        %1523 = vmatprep.subr.mxu0 0.0
        %1524 = vmatpush1.msra.mxu0 0.0
        %1525 = vmatprep.subr.mxu0 0.0
        %1526 = vmatpush1.msra.mxu0 0.0
        %1527 = vmatprep.subr.mxu0 0.0
        %1528 = vmatpush1.msra.mxu0 0.0
        %1529 = vmatprep.subr.mxu0 0.0
        %1530 = vmatpush1.msra.mxu0 0.0
        %1531 = vmatprep.subr.mxu0 0.0
        %1532 = vmatpush1.msra.mxu0 0.0
        %1533 = vmatprep.subr.mxu0 0.0
        %1534 = vmatpush1.msra.mxu0 0.0
        %1535 = vmatprep.subr.mxu0 0.0
        %1536 = vmatpush1.msra.mxu0 0.0
        %1537 = vmatprep.subr.mxu0 0.0
        %1538 = vmatpush1.msra.mxu0 0.0
        %1539 = vmatprep.subr.mxu0 0.0
        %1540 = vmatpush1.msra.mxu0 0.0
        %1541 = vmatprep.mubr.f32.mxu0 0.0
        %1542 = vmatmul.mubr.f32.gmra.mrb[0].mxu0 %v1475
        %v1543 = vpop.f32.mrb[0].mxu0
        %v1544 = vadd.f32 0.0, %v1543
        %v1545 = vpop.f32.mrb[0].mxu0
        %1546 = vdwg.mxu0
        %v1548 = vrot.slane %v1544, 3
        %v1550 = vadd.f32 %v439, %v1548
        %v1551 = vxor.u32 %v1550, 2147483648
        %v1552 = vmul.f32 %v1551, 1.442695
        %v1553 = vpow.pop %v1552
        %v1554 = vadd.f32 %v1553, 1.0
        %v1555 = vrcp.pop %v1554
        %v1556 = vmul.f32 1.0, %v1555
        %v1557 = vmul.f32 %v1472, %v1556
        %v1559 = vrot.slane %v1557, 5
        %v1560 = vsel %vm368, %v1559, 0
        %1562 = vmatprep.subr.mxu0 0.0
        %1563 = vmatpush1.msra.mxu0 %v358
        %1564 = vmatprep.subr.mxu0 0.0
        %1565 = vmatpush1.msra.mxu0 %v359
        %1566 = vmatprep.subr.mxu0 0.0
        %1567 = vmatpush1.msra.mxu0 %v360
        %1568 = vmatprep.subr.mxu0 0.0
        %1569 = vmatpush1.msra.mxu0 %v361
        %1570 = vmatprep.subr.mxu0 0.0
        %1571 = vmatpush1.msra.mxu0 0.0
        %1572 = vmatprep.subr.mxu0 0.0
        %1573 = vmatpush1.msra.mxu0 0.0
        %1574 = vmatprep.subr.mxu0 0.0
        %1575 = vmatpush1.msra.mxu0 0.0
        %1576 = vmatprep.subr.mxu0 0.0
        %1577 = vmatpush1.msra.mxu0 0.0
        %1578 = vmatprep.subr.mxu0 0.0
        %1579 = vmatpush1.msra.mxu0 0.0
        %1580 = vmatprep.subr.mxu0 0.0
        %1581 = vmatpush1.msra.mxu0 0.0
        %1582 = vmatprep.subr.mxu0 0.0
        %1583 = vmatpush1.msra.mxu0 0.0
        %1584 = vmatprep.subr.mxu0 0.0
        %1585 = vmatpush1.msra.mxu0 0.0
        %1586 = vmatprep.subr.mxu0 0.0
        %1587 = vmatpush1.msra.mxu0 0.0
        %1588 = vmatprep.subr.mxu0 0.0
        %1589 = vmatpush1.msra.mxu0 0.0
        %1590 = vmatprep.subr.mxu0 0.0
        %1591 = vmatpush1.msra.mxu0 0.0
        %1592 = vmatprep.subr.mxu0 0.0
        %1593 = vmatpush1.msra.mxu0 0.0
        %1594 = vmatprep.subr.mxu0 0.0
        %1595 = vmatpush1.msra.mxu0 0.0
        %1596 = vmatprep.subr.mxu0 0.0
        %1597 = vmatpush1.msra.mxu0 0.0
        %1598 = vmatprep.subr.mxu0 0.0
        %1599 = vmatpush1.msra.mxu0 0.0
        %1600 = vmatprep.subr.mxu0 0.0
        %1601 = vmatpush1.msra.mxu0 0.0
        %1602 = vmatprep.subr.mxu0 0.0
        %1603 = vmatpush1.msra.mxu0 0.0
        %1604 = vmatprep.subr.mxu0 0.0
        %1605 = vmatpush1.msra.mxu0 0.0
        %1606 = vmatprep.subr.mxu0 0.0
        %1607 = vmatpush1.msra.mxu0 0.0
        %1608 = vmatprep.subr.mxu0 0.0
        %1609 = vmatpush1.msra.mxu0 0.0
        %1610 = vmatprep.subr.mxu0 0.0
        %1611 = vmatpush1.msra.mxu0 0.0
        %1612 = vmatprep.subr.mxu0 0.0
        %1613 = vmatpush1.msra.mxu0 0.0
        %1614 = vmatprep.subr.mxu0 0.0
        %1615 = vmatpush1.msra.mxu0 0.0
        %1616 = vmatprep.subr.mxu0 0.0
        %1617 = vmatpush1.msra.mxu0 0.0
        %1618 = vmatprep.subr.mxu0 0.0
        %1619 = vmatpush1.msra.mxu0 0.0
        %1620 = vmatprep.subr.mxu0 0.0
        %1621 = vmatpush1.msra.mxu0 0.0
        %1622 = vmatprep.subr.mxu0 0.0
        %1623 = vmatpush1.msra.mxu0 0.0
        %1624 = vmatprep.subr.mxu0 0.0
        %1625 = vmatpush1.msra.mxu0 0.0
        %1626 = vmatprep.mubr.f32.mxu0 0.0
        %1627 = vmatmul.mubr.f32.gmra.mrb[0].mxu0 %v1560
        %v1628 = vpop.f32.mrb[0].mxu0
        %v1629 = vadd.f32 0.0, %v1628
        %v1630 = vpop.f32.mrb[0].mxu0
        %1631 = vdwg.mxu0
        %v1633 = vrot.slane %v1629, 3
        %1634 = vrot.lane.b32.xlu0 %v1633, 64
        %v1635 = vpop.permute.xlu0 %1634
        %v1637 = vadd.f32 %v439, %v1635
        %v1638 = vtanh.pop %v1637
        %1639 = vrot.lane.b32.xlu0 %v1472, 32
        %v1640 = vpop.permute.xlu0 %1639
        %v1642 = vmul.f32 %v1556, %v1640
        %v1643 = vsub.f32 1.0, %v1556
        %1645 = vrot.lane.b32.xlu0 %v1638, 96
        %v1646 = vpop.permute.xlu0 %1645
        %v1648 = vmul.f32 %v1643, %v1646
        %v1649 = vadd.f32 %v1642, %v1648
        %v1650 = vsub.f32 %v1649, %v688
        %1651 = vset.pattern.permute.xlu0 5
        %1652 = vperm.xlu0 %1651, %v348
        %v1653 = vpop.permute.xlu0 %1652
        %v1655 = vlaneseq
        %v1656 = vshrl.u32 %v1655, 7
        %v1657 = vsub.s32 5, %v1656
        %v1658 = vrot.slane %v1650, %v1657
        %v1659 = vmul.f32 %v1653, %v1658
        %1661 = vrot.lane.b32.xlu0 %v1659, 96
        %v1662 = vpop.permute.xlu0 %1661
        %v1664 = vadd.f32 %v1472, %v1662
        %v1666 = vrot.slane %v1664, 6
        %v1667 = vsel %vm368, %v1666, 0
        %1669 = vmatprep.subr.mxu0 0.0
        %1670 = vmatpush1.msra.mxu0 %v354
        %1671 = vmatprep.subr.mxu0 0.0
        %1672 = vmatpush1.msra.mxu0 %v355
        %1673 = vmatprep.subr.mxu0 0.0
        %1674 = vmatpush1.msra.mxu0 %v356
        %1675 = vmatprep.subr.mxu0 0.0
        %1676 = vmatpush1.msra.mxu0 %v357
        %1677 = vmatprep.subr.mxu0 0.0
        %1678 = vmatpush1.msra.mxu0 0.0
        %1679 = vmatprep.subr.mxu0 0.0
        %1680 = vmatpush1.msra.mxu0 0.0
        %1681 = vmatprep.subr.mxu0 0.0
        %1682 = vmatpush1.msra.mxu0 0.0
        %1683 = vmatprep.subr.mxu0 0.0
        %1684 = vmatpush1.msra.mxu0 0.0
        %1685 = vmatprep.subr.mxu0 0.0
        %1686 = vmatpush1.msra.mxu0 0.0
        %1687 = vmatprep.subr.mxu0 0.0
        %1688 = vmatpush1.msra.mxu0 0.0
        %1689 = vmatprep.subr.mxu0 0.0
        %1690 = vmatpush1.msra.mxu0 0.0
        %1691 = vmatprep.subr.mxu0 0.0
        %1692 = vmatpush1.msra.mxu0 0.0
        %1693 = vmatprep.subr.mxu0 0.0
        %1694 = vmatpush1.msra.mxu0 0.0
        %1695 = vmatprep.subr.mxu0 0.0
        %1696 = vmatpush1.msra.mxu0 0.0
        %1697 = vmatprep.subr.mxu0 0.0
        %1698 = vmatpush1.msra.mxu0 0.0
        %1699 = vmatprep.subr.mxu0 0.0
        %1700 = vmatpush1.msra.mxu0 0.0
        %1701 = vmatprep.subr.mxu0 0.0
        %1702 = vmatpush1.msra.mxu0 0.0
        %1703 = vmatprep.subr.mxu0 0.0
        %1704 = vmatpush1.msra.mxu0 0.0
        %1705 = vmatprep.subr.mxu0 0.0
        %1706 = vmatpush1.msra.mxu0 0.0
        %1707 = vmatprep.subr.mxu0 0.0
        %1708 = vmatpush1.msra.mxu0 0.0
        %1709 = vmatprep.subr.mxu0 0.0
        %1710 = vmatpush1.msra.mxu0 0.0
        %1711 = vmatprep.subr.mxu0 0.0
        %1712 = vmatpush1.msra.mxu0 0.0
        %1713 = vmatprep.subr.mxu0 0.0
        %1714 = vmatpush1.msra.mxu0 0.0
        %1715 = vmatprep.subr.mxu0 0.0
        %1716 = vmatpush1.msra.mxu0 0.0
        %1717 = vmatprep.subr.mxu0 0.0
        %1718 = vmatpush1.msra.mxu0 0.0
        %1719 = vmatprep.subr.mxu0 0.0
        %1720 = vmatpush1.msra.mxu0 0.0
        %1721 = vmatprep.subr.mxu0 0.0
        %1722 = vmatpush1.msra.mxu0 0.0
        %1723 = vmatprep.subr.mxu0 0.0
        %1724 = vmatpush1.msra.mxu0 0.0
        %1725 = vmatprep.subr.mxu0 0.0
        %1726 = vmatpush1.msra.mxu0 0.0
        %1727 = vmatprep.subr.mxu0 0.0
        %1728 = vmatpush1.msra.mxu0 0.0
        %1729 = vmatprep.subr.mxu0 0.0
        %1730 = vmatpush1.msra.mxu0 0.0
        %1731 = vmatprep.subr.mxu0 0.0
        %1732 = vmatpush1.msra.mxu0 0.0
        %1733 = vmatprep.mubr.f32.mxu0 0.0
        %1734 = vmatmul.mubr.f32.gmra.mrb[0].mxu0 %v1667
        %v1735 = vpop.f32.mrb[0].mxu0
        %v1736 = vadd.f32 0.0, %v1735
        %v1737 = vpop.f32.mrb[0].mxu0
        %1738 = vdwg.mxu0
        %v1740 = vrot.slane %v1736, 2
        %v1742 = vadd.f32 %v439, %v1740
        %v1743 = vxor.u32 %v1742, 2147483648
        %v1744 = vmul.f32 %v1743, 1.442695
        %v1745 = vpow.pop %v1744
        %v1746 = vadd.f32 %v1745, 1.0
        %v1747 = vrcp.pop %v1746
        %v1748 = vmul.f32 1.0, %v1747
        %v1749 = vmul.f32 %v1664, %v1748
        %v1751 = vrot.slane %v1749, 6
        %v1752 = vsel %vm368, %v1751, 0
        %1754 = vmatprep.subr.mxu0 0.0
        %1755 = vmatpush1.msra.mxu0 %v358
        %1756 = vmatprep.subr.mxu0 0.0
        %1757 = vmatpush1.msra.mxu0 %v359
        %1758 = vmatprep.subr.mxu0 0.0
        %1759 = vmatpush1.msra.mxu0 %v360
        %1760 = vmatprep.subr.mxu0 0.0
        %1761 = vmatpush1.msra.mxu0 %v361
        %1762 = vmatprep.subr.mxu0 0.0
        %1763 = vmatpush1.msra.mxu0 0.0
        %1764 = vmatprep.subr.mxu0 0.0
        %1765 = vmatpush1.msra.mxu0 0.0
        %1766 = vmatprep.subr.mxu0 0.0
        %1767 = vmatpush1.msra.mxu0 0.0
        %1768 = vmatprep.subr.mxu0 0.0
        %1769 = vmatpush1.msra.mxu0 0.0
        %1770 = vmatprep.subr.mxu0 0.0
        %1771 = vmatpush1.msra.mxu0 0.0
        %1772 = vmatprep.subr.mxu0 0.0
        %1773 = vmatpush1.msra.mxu0 0.0
        %1774 = vmatprep.subr.mxu0 0.0
        %1775 = vmatpush1.msra.mxu0 0.0
        %1776 = vmatprep.subr.mxu0 0.0
        %1777 = vmatpush1.msra.mxu0 0.0
        %1778 = vmatprep.subr.mxu0 0.0
        %1779 = vmatpush1.msra.mxu0 0.0
        %1780 = vmatprep.subr.mxu0 0.0
        %1781 = vmatpush1.msra.mxu0 0.0
        %1782 = vmatprep.subr.mxu0 0.0
        %1783 = vmatpush1.msra.mxu0 0.0
        %1784 = vmatprep.subr.mxu0 0.0
        %1785 = vmatpush1.msra.mxu0 0.0
        %1786 = vmatprep.subr.mxu0 0.0
        %1787 = vmatpush1.msra.mxu0 0.0
        %1788 = vmatprep.subr.mxu0 0.0
        %1789 = vmatpush1.msra.mxu0 0.0
        %1790 = vmatprep.subr.mxu0 0.0
        %1791 = vmatpush1.msra.mxu0 0.0
        %1792 = vmatprep.subr.mxu0 0.0
        %1793 = vmatpush1.msra.mxu0 0.0
        %1794 = vmatprep.subr.mxu0 0.0
        %1795 = vmatpush1.msra.mxu0 0.0
        %1796 = vmatprep.subr.mxu0 0.0
        %1797 = vmatpush1.msra.mxu0 0.0
        %1798 = vmatprep.subr.mxu0 0.0
        %1799 = vmatpush1.msra.mxu0 0.0
        %1800 = vmatprep.subr.mxu0 0.0
        %1801 = vmatpush1.msra.mxu0 0.0
        %1802 = vmatprep.subr.mxu0 0.0
        %1803 = vmatpush1.msra.mxu0 0.0
        %1804 = vmatprep.subr.mxu0 0.0
        %1805 = vmatpush1.msra.mxu0 0.0
        %1806 = vmatprep.subr.mxu0 0.0
        %1807 = vmatpush1.msra.mxu0 0.0
        %1808 = vmatprep.subr.mxu0 0.0
        %1809 = vmatpush1.msra.mxu0 0.0
        %1810 = vmatprep.subr.mxu0 0.0
        %1811 = vmatpush1.msra.mxu0 0.0
        %1812 = vmatprep.subr.mxu0 0.0
        %1813 = vmatpush1.msra.mxu0 0.0
        %1814 = vmatprep.subr.mxu0 0.0
        %1815 = vmatpush1.msra.mxu0 0.0
        %1816 = vmatprep.subr.mxu0 0.0
        %1817 = vmatpush1.msra.mxu0 0.0
        %1818 = vmatprep.mubr.f32.mxu0 0.0
        %1819 = vmatmul.mubr.f32.gmra.mrb[0].mxu0 %v1752
        %v1820 = vpop.f32.mrb[0].mxu0
        %v1821 = vadd.f32 0.0, %v1820
        %v1822 = vpop.f32.mrb[0].mxu0
        %1823 = vdwg.mxu0
        %v1825 = vrot.slane %v1821, 2
        %1826 = vrot.lane.b32.xlu0 %v1825, 64
        %v1827 = vpop.permute.xlu0 %1826
        %v1829 = vadd.f32 %v439, %v1827
        %v1830 = vtanh.pop %v1829
        %1831 = vrot.lane.b32.xlu0 %v1664, 32
        %v1832 = vpop.permute.xlu0 %1831
        %v1834 = vmul.f32 %v1748, %v1832
        %v1835 = vsub.f32 1.0, %v1748
        %1837 = vrot.lane.b32.xlu0 %v1830, 96
        %v1838 = vpop.permute.xlu0 %1837
        %v1840 = vmul.f32 %v1835, %v1838
        %v1841 = vadd.f32 %v1834, %v1840
        %v1842 = vsub.f32 %v1841, %v688
        %1843 = vset.pattern.permute.xlu0 6
        %1844 = vperm.xlu0 %1843, %v348
        %v1845 = vpop.permute.xlu0 %1844
        %v1847 = vlaneseq
        %v1848 = vshrl.u32 %v1847, 7
        %v1849 = vsub.s32 6, %v1848
        %v1850 = vrot.slane %v1842, %v1849
        %v1851 = vmul.f32 %v1845, %v1850
        %1853 = vrot.lane.b32.xlu0 %v1851, 96
        %v1854 = vpop.permute.xlu0 %1853
        %v1856 = vadd.f32 %v1664, %v1854
        %v1858 = vrot.slane %v1856, 7
        %v1859 = vsel %vm368, %v1858, 0
        %1861 = vmatprep.subr.mxu0 0.0
        %1862 = vmatpush1.msra.mxu0 %v354
        %1863 = vmatprep.subr.mxu0 0.0
        %1864 = vmatpush1.msra.mxu0 %v355
        %1865 = vmatprep.subr.mxu0 0.0
        %1866 = vmatpush1.msra.mxu0 %v356
        %1867 = vmatprep.subr.mxu0 0.0
        %1868 = vmatpush1.msra.mxu0 %v357
        %1869 = vmatprep.subr.mxu0 0.0
        %1870 = vmatpush1.msra.mxu0 0.0
        %1871 = vmatprep.subr.mxu0 0.0
        %1872 = vmatpush1.msra.mxu0 0.0
        %1873 = vmatprep.subr.mxu0 0.0
        %1874 = vmatpush1.msra.mxu0 0.0
        %1875 = vmatprep.subr.mxu0 0.0
        %1876 = vmatpush1.msra.mxu0 0.0
        %1877 = vmatprep.subr.mxu0 0.0
        %1878 = vmatpush1.msra.mxu0 0.0
        %1879 = vmatprep.subr.mxu0 0.0
        %1880 = vmatpush1.msra.mxu0 0.0
        %1881 = vmatprep.subr.mxu0 0.0
        %1882 = vmatpush1.msra.mxu0 0.0
        %1883 = vmatprep.subr.mxu0 0.0
        %1884 = vmatpush1.msra.mxu0 0.0
        %1885 = vmatprep.subr.mxu0 0.0
        %1886 = vmatpush1.msra.mxu0 0.0
        %1887 = vmatprep.subr.mxu0 0.0
        %1888 = vmatpush1.msra.mxu0 0.0
        %1889 = vmatprep.subr.mxu0 0.0
        %1890 = vmatpush1.msra.mxu0 0.0
        %1891 = vmatprep.subr.mxu0 0.0
        %1892 = vmatpush1.msra.mxu0 0.0
        %1893 = vmatprep.subr.mxu0 0.0
        %1894 = vmatpush1.msra.mxu0 0.0
        %1895 = vmatprep.subr.mxu0 0.0
        %1896 = vmatpush1.msra.mxu0 0.0
        %1897 = vmatprep.subr.mxu0 0.0
        %1898 = vmatpush1.msra.mxu0 0.0
        %1899 = vmatprep.subr.mxu0 0.0
        %1900 = vmatpush1.msra.mxu0 0.0
        %1901 = vmatprep.subr.mxu0 0.0
        %1902 = vmatpush1.msra.mxu0 0.0
        %1903 = vmatprep.subr.mxu0 0.0
        %1904 = vmatpush1.msra.mxu0 0.0
        %1905 = vmatprep.subr.mxu0 0.0
        %1906 = vmatpush1.msra.mxu0 0.0
        %1907 = vmatprep.subr.mxu0 0.0
        %1908 = vmatpush1.msra.mxu0 0.0
        %1909 = vmatprep.subr.mxu0 0.0
        %1910 = vmatpush1.msra.mxu0 0.0
        %1911 = vmatprep.subr.mxu0 0.0
        %1912 = vmatpush1.msra.mxu0 0.0
        %1913 = vmatprep.subr.mxu0 0.0
        %1914 = vmatpush1.msra.mxu0 0.0
        %1915 = vmatprep.subr.mxu0 0.0
        %1916 = vmatpush1.msra.mxu0 0.0
        %1917 = vmatprep.subr.mxu0 0.0
        %1918 = vmatpush1.msra.mxu0 0.0
        %1919 = vmatprep.subr.mxu0 0.0
        %1920 = vmatpush1.msra.mxu0 0.0
        %1921 = vmatprep.subr.mxu0 0.0
        %1922 = vmatpush1.msra.mxu0 0.0
        %1923 = vmatprep.subr.mxu0 0.0
        %1924 = vmatpush1.msra.mxu0 0.0
        %1925 = vmatprep.mubr.f32.mxu0 0.0
        %1926 = vmatmul.mubr.f32.gmra.mrb[0].mxu0 %v1859
        %v1927 = vpop.f32.mrb[0].mxu0
        %v1928 = vadd.f32 0.0, %v1927
        %v1929 = vpop.f32.mrb[0].mxu0
        %1930 = vdwg.mxu0
        %v1932 = vrot.slane %v1928, 1
        %v1934 = vadd.f32 %v439, %v1932
        %v1935 = vxor.u32 %v1934, 2147483648
        %v1936 = vmul.f32 %v1935, 1.442695
        %v1937 = vpow.pop %v1936
        %v1938 = vadd.f32 %v1937, 1.0
        %v1939 = vrcp.pop %v1938
        %v1940 = vmul.f32 1.0, %v1939
        %v1941 = vmul.f32 %v1856, %v1940
        %v1943 = vrot.slane %v1941, 7
        %v1944 = vsel %vm368, %v1943, 0
        %1946 = vmatprep.subr.mxu0 0.0
        %1947 = vmatpush1.msra.mxu0 %v358
        %1948 = vmatprep.subr.mxu0 0.0
        %1949 = vmatpush1.msra.mxu0 %v359
        %1950 = vmatprep.subr.mxu0 0.0
        %1951 = vmatpush1.msra.mxu0 %v360
        %1952 = vmatprep.subr.mxu0 0.0
        %1953 = vmatpush1.msra.mxu0 %v361
        %1954 = vmatprep.subr.mxu0 0.0
        %1955 = vmatpush1.msra.mxu0 0.0
        %1956 = vmatprep.subr.mxu0 0.0
        %1957 = vmatpush1.msra.mxu0 0.0
        %1958 = vmatprep.subr.mxu0 0.0
        %1959 = vmatpush1.msra.mxu0 0.0
        %1960 = vmatprep.subr.mxu0 0.0
        %1961 = vmatpush1.msra.mxu0 0.0
        %1962 = vmatprep.subr.mxu0 0.0
        %1963 = vmatpush1.msra.mxu0 0.0
        %1964 = vmatprep.subr.mxu0 0.0
        %1965 = vmatpush1.msra.mxu0 0.0
        %1966 = vmatprep.subr.mxu0 0.0
        %1967 = vmatpush1.msra.mxu0 0.0
        %1968 = vmatprep.subr.mxu0 0.0
        %1969 = vmatpush1.msra.mxu0 0.0
        %1970 = vmatprep.subr.mxu0 0.0
        %1971 = vmatpush1.msra.mxu0 0.0
        %1972 = vmatprep.subr.mxu0 0.0
        %1973 = vmatpush1.msra.mxu0 0.0
        %1974 = vmatprep.subr.mxu0 0.0
        %1975 = vmatpush1.msra.mxu0 0.0
        %1976 = vmatprep.subr.mxu0 0.0
        %1977 = vmatpush1.msra.mxu0 0.0
        %1978 = vmatprep.subr.mxu0 0.0
        %1979 = vmatpush1.msra.mxu0 0.0
        %1980 = vmatprep.subr.mxu0 0.0
        %1981 = vmatpush1.msra.mxu0 0.0
        %1982 = vmatprep.subr.mxu0 0.0
        %1983 = vmatpush1.msra.mxu0 0.0
        %1984 = vmatprep.subr.mxu0 0.0
        %1985 = vmatpush1.msra.mxu0 0.0
        %1986 = vmatprep.subr.mxu0 0.0
        %1987 = vmatpush1.msra.mxu0 0.0
        %1988 = vmatprep.subr.mxu0 0.0
        %1989 = vmatpush1.msra.mxu0 0.0
        %1990 = vmatprep.subr.mxu0 0.0
        %1991 = vmatpush1.msra.mxu0 0.0
        %1992 = vmatprep.subr.mxu0 0.0
        %1993 = vmatpush1.msra.mxu0 0.0
        %1994 = vmatprep.subr.mxu0 0.0
        %1995 = vmatpush1.msra.mxu0 0.0
        %1996 = vmatprep.subr.mxu0 0.0
        %1997 = vmatpush1.msra.mxu0 0.0
        %1998 = vmatprep.subr.mxu0 0.0
        %1999 = vmatpush1.msra.mxu0 0.0
        %2000 = vmatprep.subr.mxu0 0.0
        %2001 = vmatpush1.msra.mxu0 0.0
        %2002 = vmatprep.subr.mxu0 0.0
        %2003 = vmatpush1.msra.mxu0 0.0
        %2004 = vmatprep.subr.mxu0 0.0
        %2005 = vmatpush1.msra.mxu0 0.0
        %2006 = vmatprep.subr.mxu0 0.0
        %2007 = vmatpush1.msra.mxu0 0.0
        %2008 = vmatprep.subr.mxu0 0.0
        %2009 = vmatpush1.msra.mxu0 0.0
        %2010 = vmatprep.mubr.f32.mxu0 0.0
        %2011 = vmatmul.mubr.f32.gmra.mrb[0].mxu0 %v1944
        %v2012 = vpop.f32.mrb[0].mxu0
        %v2013 = vadd.f32 0.0, %v2012
        %v2014 = vpop.f32.mrb[0].mxu0
        %2015 = vdwg.mxu0
        %v2017 = vrot.slane %v2013, 1
        %2018 = vrot.lane.b32.xlu0 %v2017, 64
        %v2019 = vpop.permute.xlu0 %2018
        %v2021 = vadd.f32 %v439, %v2019
        %v2022 = vtanh.pop %v2021
        %2023 = vrot.lane.b32.xlu0 %v1856, 32
        %v2024 = vpop.permute.xlu0 %2023
        %v2026 = vmul.f32 %v1940, %v2024
        %v2027 = vsub.f32 1.0, %v1940
        %2029 = vrot.lane.b32.xlu0 %v2022, 96
        %v2030 = vpop.permute.xlu0 %2029
        %v2032 = vmul.f32 %v2027, %v2030
        %v2033 = vadd.f32 %v2026, %v2032
        %vm2034 = vcmask 1040384
        %v2035 = vsel %vm2034, %v686, %v881
        %vm2036 = vcmask 1041408
        %v2037 = vsel %vm2036, %v2035, %v1073
        %vm2038 = vcmask 1042432
        %v2039 = vsel %vm2038, %v2037, %v1265
        %vm2040 = vcmask 1043456
        %v2041 = vsel %vm2040, %v2039, %v1457
        %vm2042 = vcmask 1044480
        %v2043 = vsel %vm2042, %v2041, %v1649
        %vm2044 = vcmask 1045504
        %v2045 = vsel %vm2044, %v2043, %v1841
        %vm2046 = vcmask 1046528
        %v2047 = vsel %vm2046, %v2045, %v2033
        %2049 = vrot.lane.b32.xlu0 %v2047, 96
        %v2050 = vpop.permute.xlu0 %2049
        %v2052 = vcombine.high %v2050, 0.0
        %v2054 = vunpack.c.l.s4 1983009808
        %v2055 = vunpack.c.0.s8 %v2054
        %v2056 = vlaneseq
        %v2057 = vshrl.u32 %v2056, 7
        %v2058 = vsub.s32 %v2055, %v2057
        %v2059 = vrot.slane %v2050, %v2058
        %v2061 = vunpack.c.l.s4 1983009808
        %v2062 = vunpack.c.0.s8 %v2061
        %v2063 = vlaneseq
        %v2064 = vshrl.u32 %v2063, 7
        %v2065 = vsub.s32 %v2062, %v2064
        %v2066 = vrot.slane %v2052, %v2065
        %v2067 = vcombine.high %v2059, 0.0
        %v2069 = vunpack.c.l.s4 1934713408
        %v2070 = vunpack.c.0.s8 %v2069
        %v2071 = vlaneseq
        %v2072 = vshrl.u32 %v2071, 7
        %v2073 = vsub.s32 %v2070, %v2072
        %v2074 = vrot.slane %v2059, %v2073
        %v2076 = vunpack.c.l.s4 1934713408
        %v2077 = vunpack.c.0.s8 %v2076
        %v2078 = vlaneseq
        %v2079 = vshrl.u32 %v2078, 7
        %v2080 = vsub.s32 %v2077, %v2079
        %v2081 = vrot.slane %v2067, %v2080
        %v2082 = vcombine.high %v2066, 0.0
        %v2084 = vunpack.c.l.s4 1934713408
        %v2085 = vunpack.c.0.s8 %v2084
        %v2086 = vlaneseq
        %v2087 = vshrl.u32 %v2086, 7
        %v2088 = vsub.s32 %v2085, %v2087
        %v2089 = vrot.slane %v2066, %v2088
        %v2091 = vunpack.c.l.s4 1934713408
        %v2092 = vunpack.c.0.s8 %v2091
        %v2093 = vlaneseq
        %v2094 = vshrl.u32 %v2093, 7
        %v2095 = vsub.s32 %v2092, %v2094
        %v2096 = vrot.slane %v2082, %v2095
        %v2097 = vcombine.high %v2074, 0.0
        %v2098 = vcombine.high %v2081, 0.0
        %v2099 = vcombine.high %v2089, 0.0
        %v2100 = vcombine.high %v2096, 0.0
        %2102 = vrot.lane.b32.xlu0 %v2097, 32
        %v2103 = vpop.permute.xlu0 %2102
        %2106 = vrot.lane.b32.xlu0 %v2081, 64
        %v2107 = vpop.permute.xlu0 %2106
        %2110 = vrot.lane.b32.xlu0 %v2098, 96
        %v2111 = vpop.permute.xlu0 %2110
        %2114 = vrot.lane.b32.xlu0 %v2099, 32
        %v2115 = vpop.permute.xlu0 %2114
        %2118 = vrot.lane.b32.xlu0 %v2096, 64
        %v2119 = vpop.permute.xlu0 %2118
        %2122 = vrot.lane.b32.xlu0 %v2100, 96
        %v2123 = vpop.permute.xlu0 %2122
        %v2125 = vsel %vm368, %v2074, %v2103
        %vm2126 = vcmask 523264
        %v2127 = vsel %vm2126, %v2125, %v2107
        %vm2128 = vcmask 785408
        %v2129 = vsel %vm2128, %v2127, %v2111
        %v2130 = vsel %vm368, %v2089, %v2115
        %v2131 = vsel %vm2126, %v2130, %v2119
        %v2132 = vsel %vm2128, %v2131, %v2123
        %v2135 = vcombine.low %v2129, %v2132
        %v2137 = vunpack.c.l.s4 1966171168
        %v2138 = vunpack.c.0.s8 %v2137
        %v2139 = vlaneseq
        %v2140 = vshrl.u32 %v2139, 7
        %v2141 = vsub.s32 %v2138, %v2140
        %v2142 = vrot.slane %v2135, %v2141
        %v2144 = vunpack.c.l.s4 1966171168
        %v2145 = vunpack.c.0.s8 %v2144
        %v2146 = vlaneseq
        %v2147 = vshrl.u32 %v2146, 7
        %v2148 = vsub.s32 %v2145, %v2147
        %v2149 = vrot.slane %v2142, %v2148
        %v2151 = vlaneseq
        %vm2152 = vcmp.ge.s32.totalorder %v2151, 0
        %vm2153 = vcmp.lt.s32.totalorder %v2151, 256
        %vm2154 = vmand %vm2152, %vm2153
        %2155 = vst.msk [vmem:[%s346] sm:$0x3] %vm2154, %v2149
        %s2156 = sand.u32 %s171, 1
        %s2157 = scalar_lea.sflag [#allocation4], %s2156
        %s2158 = sand.u32 %s171, 1
        %s2159 = smul.addr %s2158, 2
        %s2160 = scalar_lea.vmem [#allocation11], %s2159
        // Predicated region
        $region65: #{tpu_custom_call.1} parent=43 // pred_check
          %p2161 = pneg %p181
        $region66: #{tpu_custom_call.1} parent=43 // pred_check_branch
          %2163 = sbr.rel (%p2161) target = $region68
        $region67: #{tpu_custom_call.1} parent=43 // pred_region
          %s2165 = ssub.s32 32, 32
          %2166 = vsyncadd %s2157, %s2165
          %s2167 = smul.addr %s27, 2
          %s2168 = smul.addr %s2167, 16
          %s2169 = scalar_lea.hbm %s6, %s2168
          %s2171 = sshll.u32 %s2160, 4
          %s2172 = int_to_ptr.vmem [resolvable:$true] %s2171
          %2174 = dma.vmem_to_hbm [thread:$0]  %s2172, 32, %s2169, %s2157
        $region68: #{tpu_custom_call.1} parent=43 // pred_fallthru
          _
      $region44: #{tpu_custom_call.1} parent=5 // pred_fallthru
        _
      %p2175 = scmp.le.s32.totalorder 2, %s22
      // Predicated region
      $region69: #{tpu_custom_call.1} parent=5 // pred_check
        %p2176 = pneg %p2175
      $region70: #{tpu_custom_call.1} parent=5 // pred_check_branch
        %2178 = sbr.rel (%p2176) target = $region72
      $region71: #{tpu_custom_call.1} parent=5 // pred_region
        %s2179 = ssub.s32 %s22, 2
        // Predicated region
        $region73: #{tpu_custom_call.1} parent=71 // pred_check
          %p2180 = pneg %p187
        $region74: #{tpu_custom_call.1} parent=71 // pred_check_branch
          %2182 = sbr.rel (%p2180) target = $region76
        $region75: #{tpu_custom_call.1} parent=71 // pred_region
          %s2183 = sand.u32 %s172, 1
          %s2184 = scalar_lea.sflag [#allocation4], %s2183
          %s2185 = sand.u32 %s172, 1
          %s2186 = smul.addr %s2185, 2
          %s2187 = scalar_lea.vmem [#allocation11], %s2186
          %2188 = dma.done %s2184, 32
        $region76: #{tpu_custom_call.1} parent=71 // pred_fallthru
          _
      $region72: #{tpu_custom_call.1} parent=5 // pred_fallthru
        _
    $region6: #{tpu_custom_call.1} parent=1 // loop_footer
      %s26 = sadd.s32 1, %s22
    $region7: #{tpu_custom_call.1} parent=1 // loop_footer_branch
      %21 = sbr.rel target = $region3
    $region8: #{tpu_custom_call.1} parent=1 // loop_exit
      _
    %2189 = vsyncpa [#allocation3], 1
    %s2190 = scalar_lea.sflag [#allocation3], 1
    %2191 = vsyncpa %s2190, 1
    %2192 = vsyncpa [#allocation6], 1
    %s2193 = scalar_lea.sflag [#allocation6], 1
    %2194 = vsyncpa %s2193, 1
    %2195 = vsyncpa [#allocation9], 1
    %2196 = vsyncpa [#allocation4], 1
    %s2197 = scalar_lea.sflag [#allocation4], 1
    %2198 = vsyncpa %s2197, 1

</llo_original>
